<compile_context>
chip_gen: v7x
topology: tpu7x:2x2x1
jax: 0.10.0
libtpu: 0.0.40
codegen_flags: <defaults>
</compile_context>

<pallas_src>
import functools
import math

import jax
import jax.numpy as jnp
from jax import lax
from jax.experimental import pallas as pl
from jax.experimental.pallas import tpu as pltpu

_BN_EPS = 1e-5
_LANE = 128
_MAX_TILE_M = 1024


def _round_up(x, m):
    return (x + m - 1) // m * m


def _cdiv(a, b):
    return -(-a // b)


# ---------------------------------------------------------------------------
# Generation-aware VMEM budgeting (review: budget the full working set and set
# vmem_limit_bytes explicitly; v7x ~64 MiB physical, v5e 16 MiB scoped default)
# ---------------------------------------------------------------------------
@functools.lru_cache(maxsize=None)
def _vmem_caps():
    cap = 64 * 1024 * 1024  # conservative fallback (v7x per-TC physical VMEM)
    try:
        info = pltpu.get_tpu_info()
        cap = int(getattr(info, "vmem_capacity_bytes", cap))
    except Exception:
        pass
    ws_budget = min(int(cap * 0.4), 28 * 1024 * 1024)   # working-set cap
    vmem_limit = min(int(cap * 0.75), 100 * 1024 * 1024)
    return ws_budget, vmem_limit


def _compiler_params():
    _, vmem_limit = _vmem_caps()
    return pltpu.CompilerParams(dimension_semantics=("parallel",),
                                vmem_limit_bytes=vmem_limit)


def _pick_tiles(m, k, cp):
    """Pick (TM, ntiles, Mp) so the full double-buffered working set fits the
    per-generation VMEM budget, with >=2 tiles (megacore) and minimal tail pad.

    Working set ~ 2*TM*K*2 (patch bufs) + 2*K*Cp*2 (weight bufs, accounted at
    2x since pipeline_mode=pl.Buffered(1) is not relied on) + 2*TM*Cp*2 (out).
    TM is aligned to 8 rows (smallest legal sublane step) to keep tail padding
    to a few rows; 128-row alignment would add up to 127 wasted rows per tile
    for only a marginal MXU-feed benefit.
    """
    ws_budget, _ = _vmem_caps()
    m8 = _round_up(max(m, 8), 8)
    w_bytes = 2 * k * cp * 2
    avail = ws_budget - w_bytes - 256 * 1024
    per_row = 4 * (k + cp)                    # bytes of VMEM per TM row (bf16)
    tm_cap = max(8, avail // per_row) if avail > 0 else 8
    tm_cap = max(8, min(_MAX_TILE_M, (tm_cap // 8) * 8))
    min_tiles = 2 if m8 >= 16 else 1          # keep both v7x TensorCores busy
    ntiles = max(min_tiles, _cdiv(m8, tm_cap))
    tm = _round_up(_cdiv(m8, ntiles), 8)
    return tm, ntiles, ntiles * tm


# ---------------------------------------------------------------------------
# Pallas kernels
# ---------------------------------------------------------------------------
def _apply_act(y, act):
    if act == "relu":
        return jnp.maximum(y, 0.0)
    if act == "leaky_relu":
        return jnp.where(y > 0, y, 0.2 * y)
    if act == "tanh":
        return jnp.tanh(y)
    return y


def _matmul_act_kernel(p_ref, w_ref, o_ref, *, act):
    """One MXU matmul tile + fused activation, bf16 output (no BatchNorm)."""
    y = jnp.dot(p_ref[...], w_ref[...], preferred_element_type=jnp.float32)
    o_ref[...] = _apply_act(y, act).astype(o_ref.dtype)


def _matmul_stats_kernel(p_ref, w_ref, st_ref):
    """Stats-only pass: per-tile per-column sum / sum-of-squares (f32)."""
    y = jnp.dot(p_ref[...], w_ref[...], preferred_element_type=jnp.float32)
    s1 = jnp.sum(y, axis=0, keepdims=True)
    s2 = jnp.sum(y * y, axis=0, keepdims=True)
    st_ref[...] = jnp.concatenate([s1, s2], axis=0).reshape(st_ref.shape)


def _matmul_stats_y_kernel(p_ref, w_ref, y_ref, st_ref):
    """Stats + bf16 y writeback (used when re-reading patches is pricier)."""
    y = jnp.dot(p_ref[...], w_ref[...], preferred_element_type=jnp.float32)
    s1 = jnp.sum(y, axis=0, keepdims=True)
    s2 = jnp.sum(y * y, axis=0, keepdims=True)
    y_ref[...] = y.astype(y_ref.dtype)
    st_ref[...] = jnp.concatenate([s1, s2], axis=0).reshape(st_ref.shape)


def _matmul_bn_act_kernel(p_ref, w_ref, sc_ref, sh_ref, o_ref, *, act):
    """Recompute pass: matmul + fused scale/shift + activation, bf16 out."""
    y = jnp.dot(p_ref[...], w_ref[...], preferred_element_type=jnp.float32)
    y = y * sc_ref[...] + sh_ref[...]
    o_ref[...] = _apply_act(y, act).astype(o_ref.dtype)


def _scale_shift_act_kernel(y_ref, sc_ref, sh_ref, o_ref, *, act):
    """Writeback pass 2: bf16 y -> f32 scale/shift + activation -> bf16 out."""
    y = y_ref[...].astype(jnp.float32) * sc_ref[...] + sh_ref[...]
    o_ref[...] = _apply_act(y, act).astype(o_ref.dtype)


# ---------------------------------------------------------------------------
# Layer runner: lane-dense, M-tiled matmul (+BN) (+activation)
# ---------------------------------------------------------------------------
def _matmul_layer(patches, w_pad, *, ceff, group, act, use_bn,
                  gamma=None, beta=None):
    """Returns act(BN(patches @ w_pad))[:, :ceff] as an (M, ceff) bf16 slab.

    patches : (M, K) bf16 im2col slab (K = taps * Cin).
    w_pad   : (K, Cp) bf16, Cp = round_up(group*Cout, 128); col % Cout is the
              BatchNorm channel (group-major column ordering).
    """
    M, K = patches.shape
    Cp = w_pad.shape[1]
    cout = ceff // group

    TM, ntiles, Mp = _pick_tiles(M, K, Cp)
    p = patches if Mp == M else jnp.pad(patches, ((0, Mp - M), (0, 0)))

    p_spec = pl.BlockSpec((TM, K), lambda i: (i, 0))
    w_spec = pl.BlockSpec((K, Cp), lambda i: (0, 0))   # resident weights
    o_spec = pl.BlockSpec((TM, Cp), lambda i: (i, 0))
    st_spec = pl.BlockSpec((1, 2, Cp), lambda i: (i, 0, 0))
    cparams = _compiler_params()

    if not use_bn:
        out = pl.pallas_call(
            functools.partial(_matmul_act_kernel, act=act),
            grid=(ntiles,),
            in_specs=[p_spec, w_spec],
            out_specs=o_spec,
            out_shape=jax.ShapeDtypeStruct((Mp, Cp), jnp.bfloat16),
            compiler_params=cparams,
        )(p, w_pad)
        return out[:M, :ceff]

    # Traffic rule (review): recompute re-reads 2*K bytes/row of patches,
    # writeback costs 4*Cp bytes/row of bf16 y write+read.  Recompute wins
    # iff K <= 2*Cp (always true once in-kernel im2col removes the 9x dup).
    recompute = K <= 2 * Cp

    if recompute:
        st = pl.pallas_call(
            _matmul_stats_kernel,
            grid=(ntiles,),
            in_specs=[p_spec, w_spec],
            out_specs=st_spec,
            out_shape=jax.ShapeDtypeStruct((ntiles, 2, Cp), jnp.float32),
            compiler_params=cparams,
        )(p, w_pad)
        y = None
    else:
        y, st = pl.pallas_call(
            _matmul_stats_y_kernel,
            grid=(ntiles,),
            in_specs=[p_spec, w_spec],
            out_specs=(o_spec, st_spec),
            out_shape=(jax.ShapeDtypeStruct((Mp, Cp), jnp.bfloat16),
                       jax.ShapeDtypeStruct((ntiles, 2, Cp), jnp.float32)),
            compiler_params=cparams,
        )(p, w_pad)

    # Finalize train-mode BatchNorm statistics.  Padded Mp rows contribute
    # zeros to both sums, and count = M*group excludes them -- keep that
    # invariant if the tiling/padding logic ever changes.
    count = M * group
    s1 = jnp.sum(st[:, 0, :ceff], axis=0).reshape(group, cout).sum(axis=0)
    s2 = jnp.sum(st[:, 1, :ceff], axis=0).reshape(group, cout).sum(axis=0)
    mean = s1 / count
    var = jnp.maximum(s2 / count - mean * mean, 0.0)
    scale = gamma * lax.rsqrt(var + _BN_EPS)
    shift = beta - mean * scale
    sc = jnp.pad(jnp.tile(scale, group), (0, Cp - ceff)).reshape(1, Cp)
    sh = jnp.pad(jnp.tile(shift, group), (0, Cp - ceff)).reshape(1, Cp)
    v_spec = pl.BlockSpec((1, Cp), lambda i: (0, 0))

    if recompute:
        out = pl.pallas_call(
            functools.partial(_matmul_bn_act_kernel, act=act),
            grid=(ntiles,),
            in_specs=[p_spec, w_spec, v_spec, v_spec],
            out_specs=o_spec,
            out_shape=jax.ShapeDtypeStruct((Mp, Cp), jnp.bfloat16),
            compiler_params=cparams,
        )(p, w_pad, sc, sh)
    else:
        out = pl.pallas_call(
            functools.partial(_scale_shift_act_kernel, act=act),
            grid=(ntiles,),
            in_specs=[o_spec, v_spec, v_spec],
            out_specs=o_spec,
            out_shape=jax.ShapeDtypeStruct((Mp, Cp), jnp.bfloat16),
            compiler_params=cparams,
        )(y, sc, sh)
    return out[:M, :ceff]


# ---------------------------------------------------------------------------
# Wrapper-side layout prep (im2col, depth-to-space)
# ---------------------------------------------------------------------------
def _im2col(xp, Ho, Wo, k):
    """xp (N, Hp, Wp, C) padded NHWC (bf16) -> (N*Ho*Wo, k*k*C) patch slab."""
    N, _, _, C = xp.shape
    cols = [xp[:, dh:dh + Ho, dw:dw + Wo, :] for dh in range(k) for dw in range(k)]
    return jnp.concatenate(cols, axis=-1).reshape(N * Ho * Wo, k * k * C)


def _layer_forward(x, layer):
    kind = layer["kind"]
    if kind == "convt1x1":
        # ConvTranspose2d(Cin, Cout, k=4, s=1, p=0) on a 1x1 input is a pure
        # matmul with M == batch.  Per review, Pallas call overhead dominates
        # here, so run it as a plain XLA dot (bf16 operands, f32 accumulation)
        # with BN + ReLU in f32, then hand a bf16 NHWC map to the next layer.
        Cout = layer["Cout"]
        N = x.shape[0]
        xv = x.reshape(N, -1).astype(jnp.bfloat16)
        y = jnp.dot(xv, layer["w_mat"], preferred_element_type=jnp.float32)
        y = y.reshape(N, 16, Cout)
        mean = jnp.mean(y, axis=(0, 1))
        var = jnp.mean(jnp.square(y - mean), axis=(0, 1))
        y = (y - mean) * lax.rsqrt(var + _BN_EPS) * layer["gamma"] + layer["beta"]
        y = jnp.maximum(y, 0.0)
        return y.reshape(N, 4, 4, Cout).astype(jnp.bfloat16)

    if kind == "convt_s2":
        # ConvTranspose2d(k=4, s=2, p=1) via 4-phase space-to-depth: one
        # (N*H*W, 9*Cin) x (9*Cin, 4*Cout) matmul, then parity interleave.
        Cout = layer["Cout"]
        N, H, Wsp, _ = x.shape
        xp = jnp.pad(x, ((0, 0), (1, 1), (1, 1), (0, 0)))
        patches = _im2col(xp, H, Wsp, 3)          # bf16
        slab = _matmul_layer(patches, layer["w_pad"], ceff=layer["Ceff"],
                             group=4, act=layer["act"], use_bn=layer["bn"],
                             gamma=layer["gamma"], beta=layer["beta"])
        y = slab.reshape(N, H, Wsp, 2, 2, Cout)
        return y.transpose(0, 1, 3, 2, 4, 5).reshape(N, 2 * H, 2 * Wsp, Cout)

    # kind == "conv": Conv2d(k=3, s=1, p=1)
    Cout = layer["Cout"]
    N, H, Wsp, _ = x.shape
    pad = layer["padding"]
    xp = jnp.pad(x, ((0, 0), (pad, pad), (pad, pad), (0, 0)))
    patches = _im2col(xp, H, Wsp, 3)              # bf16
    slab = _matmul_layer(patches, layer["w_pad"], ceff=layer["Ceff"],
                         group=1, act=layer["act"], use_bn=layer["bn"],
                         gamma=layer["gamma"], beta=layer["beta"])
    return slab.reshape(N, H, Wsp, Cout)


def decoder_forward(layers, latent_nchw):
    x = jnp.transpose(latent_nchw.astype(jnp.float32), (0, 2, 3, 1))  # NCHW->NHWC
    x = x.astype(jnp.bfloat16)
    for layer in layers:
        x = _layer_forward(x, layer)
    return jnp.transpose(x, (0, 3, 1, 2)).astype(jnp.float32)          # NHWC->NCHW


# ---------------------------------------------------------------------------
# Parameter construction (mirrors Decoder.__init__) + one-time weight prep
# ---------------------------------------------------------------------------
def _convt_s2_weight(W):
    """ConvTranspose2d(k=4, s=2, p=1) weight (Cin, Cout, 4, 4) -> space-to-depth
    matrix (9*Cin, 4*Cout): row = (dh*3+dw)*Cin + ci, col = (a*2+b)*Cout + co."""
    Cin, Cout = W.shape[0], W.shape[1]
    Wb = jnp.zeros((3, 3, Cin, 2, 2, Cout), W.dtype)
    for a in range(2):
        for b in range(2):
            for th in range(2):
                for tw in range(2):
                    dh, kh = a + th, 3 - a - 2 * th
                    dw, kw = b + tw, 3 - b - 2 * tw
                    Wb = Wb.at[dh, dw, :, a, b, :].set(W[:, :, kh, kw])
    return Wb.reshape(9 * Cin, 4 * Cout)


def _prepare_layer(layer):
    """Hoist all weight re-layout / lane padding / bf16 casts to init."""
    kind = layer["kind"]
    W = layer["W"]
    if kind == "convt1x1":
        Cin, Cout = W.shape[0], W.shape[1]
        layer["Cout"] = Cout
        layer["w_mat"] = (W.transpose(0, 2, 3, 1)
                          .reshape(Cin, 16 * Cout).astype(jnp.bfloat16))
    elif kind == "convt_s2":
        Cout = W.shape[1]
        ceff = 4 * Cout
        cp = _round_up(ceff, _LANE)
        wm = _convt_s2_weight(W)
        layer["Cout"], layer["Ceff"] = Cout, ceff
        layer["w_pad"] = jnp.pad(wm, ((0, 0), (0, cp - ceff))).astype(jnp.bfloat16)
    else:  # conv
        Cout, Cin = W.shape[0], W.shape[1]
        cp = _round_up(Cout, _LANE)
        wm = W.transpose(2, 3, 1, 0).reshape(9 * Cin, Cout)
        layer["Cout"], layer["Ceff"] = Cout, Cout
        layer["w_pad"] = jnp.pad(wm, ((0, 0), (0, cp - Cout))).astype(jnp.bfloat16)
    return layer


def init_decoder_params(key, input_size, latent_vec_size, num_input_channels,
                        n_features, extra_layers=0):
    exp_factor = math.ceil(math.log(min(input_size) // 2, 2)) - 2
    n_in = n_features * 2 ** exp_factor
    layers = []

    def w_init(k, shape):
        return 0.02 * jax.random.normal(k, shape, jnp.float32)

    def bn_init(k, c):
        k1, k2 = jax.random.split(k)
        return (1.0 + 0.1 * jax.random.normal(k1, (c,), jnp.float32),
                0.1 * jax.random.normal(k2, (c,), jnp.float32))

    # latent_input: ConvTranspose(latent -> n_in, k4 s1 p0, bias=False)+BN+ReLU
    key, kw, kb = jax.random.split(key, 3)
    g, b = bn_init(kb, n_in)
    layers.append(dict(kind="convt1x1", W=w_init(kw, (latent_vec_size, n_in, 4, 4)),
                       stride=1, padding=0, bn=True, act="relu", gamma=g, beta=b))

    # inverse_pyramid: ConvTranspose(n -> n/2, k4 s2 p1, bias=False)+BN+ReLU
    pyramid_dim = min(*input_size) // 2
    nf = n_in
    while pyramid_dim > 4:
        key, kw, kb = jax.random.split(key, 3)
        g, b = bn_init(kb, nf // 2)
        layers.append(dict(kind="convt_s2", W=w_init(kw, (nf, nf // 2, 4, 4)),
                           stride=2, padding=1, bn=True, act="relu",
                           gamma=g, beta=b))
        nf //= 2
        pyramid_dim //= 2

    # extra_layers: Conv2d(n -> n, k3 s1 p1, bias=False) + BN + LeakyReLU(0.2)
    for _ in range(extra_layers):
        key, kw, kb = jax.random.split(key, 3)
        g, b = bn_init(kb, nf)
        layers.append(dict(kind="conv", W=w_init(kw, (nf, nf, 3, 3)),
                           stride=1, padding=1, bn=True, act="leaky_relu",
                           gamma=g, beta=b))

    # final_layers: ConvTranspose(n -> C, k4 s2 p1, bias=False) + Tanh
    key, kw = jax.random.split(key)
    layers.append(dict(kind="convt_s2", W=w_init(kw, (nf, num_input_channels, 4, 4)),
                       stride=2, padding=1, bn=False, act="tanh",
                       gamma=None, beta=None))
    return [_prepare_layer(layer) for layer in layers]


# ---------------------------------------------------------------------------
# Pure-JAX reference (bf16 conv operands / f32 BN+activations) for validation
# ---------------------------------------------------------------------------
def _ref_convt(x, W, stride, padding):
    k = W.shape[-1]
    wf = W[:, :, ::-1, ::-1].transpose(2, 3, 0, 1)      # (kh, kw, Cin, Cout)
    return lax.conv_general_dilated(
        x.astype(jnp.bfloat16), wf.astype(jnp.bfloat16),
        window_strides=(1, 1),
        padding=[(k - 1 - padding, k - 1 - padding)] * 2,
        lhs_dilation=(stride, stride),
        dimension_numbers=("NHWC", "HWIO", "NHWC"),
        preferred_element_type=jnp.float32)


def _ref_conv(x, W, padding):
    wf = W.transpose(2, 3, 1, 0)
    return lax.conv_general_dilated(
        x.astype(jnp.bfloat16), wf.astype(jnp.bfloat16),
        window_strides=(1, 1),
        padding=[(padding, padding)] * 2,
        dimension_numbers=("NHWC", "HWIO", "NHWC"),
        preferred_element_type=jnp.float32)


def decoder_forward_ref(layers, latent_nchw):
    x = jnp.transpose(latent_nchw.astype(jnp.float32), (0, 2, 3, 1))
    for layer in layers:
        if layer["kind"] == "conv":
            y = _ref_conv(x, layer["W"], layer["padding"])
        else:
            y = _ref_convt(x, layer["W"], layer["stride"], layer["padding"])
        if layer["bn"]:
            mean = jnp.mean(y, axis=(0, 1, 2))
            var = jnp.mean(jnp.square(y - mean), axis=(0, 1, 2))
            y = (y - mean) * lax.rsqrt(var + _BN_EPS) * layer["gamma"] + layer["beta"]
        if layer["act"] == "relu":
            y = jnp.maximum(y, 0.0)
        elif layer["act"] == "leaky_relu":
            y = jnp.where(y > 0, y, 0.2 * y)
        elif layer["act"] == "tanh":
            y = jnp.tanh(y)
        x = y
    return jnp.transpose(x, (0, 3, 1, 2))


if __name__ == "__main__":
    # Small config consistent with the module: Decoder(input_size=(16,16),
    # latent_vec_size=32, num_input_channels=3, n_features=16, extra_layers=1)
    input_size = (16, 16)
    latent_vec_size = 32
    num_input_channels = 3
    n_features = 16
    extra_layers = 1
    batch = 2

    key = jax.random.PRNGKey(0)
    k_params, k_x = jax.random.split(key)
    layers = init_decoder_params(k_params, input_size, latent_vec_size,
                                 num_input_channels, n_features, extra_layers)
    latent = jax.random.normal(k_x, (batch, latent_vec_size, 1, 1), jnp.float32)

    fwd = jax.jit(functools.partial(decoder_forward, layers))
    out = fwd(latent)
    jax.block_until_ready(out)

    assert out.shape == (batch, num_input_channels, *input_size), out.shape
    assert out.dtype == jnp.float32
    assert bool(jnp.all(jnp.isfinite(out)))
    assert bool(jnp.all(jnp.abs(out) <= 1.0 + 1e-5))  # tanh range

    # Tolerance accounts for bf16 inter-layer activations / bf16 y writeback
    # in the kernel vs. the f32-activation reference.
    ref = decoder_forward_ref(layers, latent)
    err = jnp.abs(out - ref)
    max_err = float(jnp.max(err))
    mean_err = float(jnp.mean(err))
    assert max_err < 7.5e-2 and mean_err < 1e-2, (max_err, mean_err)

    print("KERNEL_OK")
</pallas_src>

<mosaic_0001>
module attributes {stable_mosaic.version = 11 : i64} {
  func.func @_matmul_stats_y_kernel(%arg0: i32, %arg1: memref<16x288xbf16, #tpu.memory_space<vmem>>, %arg2: memref<288x128xbf16, #tpu.memory_space<vmem>>, %arg3: memref<16x128xbf16, #tpu.memory_space<vmem>>, %arg4: memref<1x2x128xf32, #tpu.memory_space<vmem>>) attributes {dimension_semantics = [#tpu.dimension_semantics<parallel>], iteration_bounds = array<i64: 2>, scalar_prefetch = 0 : i64, scratch_operands = 0 : i64, tpu.core_type = #tpu.core_type<tc>, window_params = [{transform_indices = @transform_0, window_bounds = array<i64: 16, 288>}, {pipeline_mode = #tpu.pipeline_mode<synchronous>, transform_indices = @transform_1, window_bounds = array<i64: 288, 128>}, {transform_indices = @transform_2, window_bounds = array<i64: 16, 128>}, {transform_indices = @transform_3, window_bounds = array<i64: 1, 2, 128>}]} {
    %c0 = arith.constant 0 : index
    %c0_0 = arith.constant 0 : index
    %0 = vector.load %arg1[%c0, %c0_0] : memref<16x288xbf16, #tpu.memory_space<vmem>>, vector<16x288xbf16>
    %c0_1 = arith.constant 0 : index
    %c0_2 = arith.constant 0 : index
    %1 = vector.load %arg2[%c0_1, %c0_2] : memref<288x128xbf16, #tpu.memory_space<vmem>>, vector<288x128xbf16>
    %cst = arith.constant dense<0.000000e+00> : vector<16x128xf32>
    %2 = tpu.matmul %0, %1, %cst {dimension_numbers = #tpu.dot_dimension_numbers<[1], [0], [0], [1], [0, 0, 1, 1], [], []>} : vector<16x288xbf16>, vector<288x128xbf16>, vector<16x128xf32> -> vector<16x128xf32>
    %cst_3 = arith.constant dense<0.000000e+00> : vector<128xf32>
    %3 = vector.multi_reduction <add>, %2, %cst_3 [0] : vector<16x128xf32> to vector<128xf32>
    %4 = vector.shape_cast %3 : vector<128xf32> to vector<1x128xf32>
    %5 = arith.mulf %2, %2 : vector<16x128xf32>
    %cst_4 = arith.constant dense<0.000000e+00> : vector<128xf32>
    %6 = vector.multi_reduction <add>, %5, %cst_4 [0] : vector<16x128xf32> to vector<128xf32>
    %7 = vector.shape_cast %6 : vector<128xf32> to vector<1x128xf32>
    %8 = arith.truncf %2 : vector<16x128xf32> to vector<16x128xbf16>
    %c0_5 = arith.constant 0 : index
    %c0_6 = arith.constant 0 : index
    %9 = vector.load %arg3[%c0_5, %c0_6] : memref<16x128xbf16, #tpu.memory_space<vmem>>, vector<16x128xbf16>
    tpu.vector_store %arg3[%c0_5, %c0_6], %8 {strides = array<i32>} : memref<16x128xbf16, #tpu.memory_space<vmem>>, vector<16x128xbf16>,
    %10 = tpu.concatenate %4, %7 in 0 : vector<1x128xf32>, vector<1x128xf32> -> vector<2x128xf32>
    %11 = vector.shape_cast %10 : vector<2x128xf32> to vector<1x2x128xf32>
    %c0_7 = arith.constant 0 : index
    %c0_8 = arith.constant 0 : index
    %c0_9 = arith.constant 0 : index
    %12 = vector.load %arg4[%c0_7, %c0_8, %c0_9] : memref<1x2x128xf32, #tpu.memory_space<vmem>>, vector<1x2x128xf32>
    tpu.vector_store %arg4[%c0_7, %c0_8, %c0_9], %11 {strides = array<i32>} : memref<1x2x128xf32, #tpu.memory_space<vmem>>, vector<1x2x128xf32>,
    return
  }
  func.func @transform_0(%arg0: i32) -> (i32, i32) {
    %c0_i32 = arith.constant 0 : i32
    %c0_i32_0 = arith.constant 0 : i32
    return %arg0, %c0_i32 : i32, i32
  }
  func.func @transform_1(%arg0: i32) -> (i32, i32) {
    %c0_i32 = arith.constant 0 : i32
    %c0_i32_0 = arith.constant 0 : i32
    %c0_i32_1 = arith.constant 0 : i32
    return %c0_i32, %c0_i32_0 : i32, i32
  }
  func.func @transform_2(%arg0: i32) -> (i32, i32) {
    %c0_i32 = arith.constant 0 : i32
    %c0_i32_0 = arith.constant 0 : i32
    return %arg0, %c0_i32 : i32, i32
  }
  func.func @transform_3(%arg0: i32) -> (i32, i32, i32) {
    %c0_i32 = arith.constant 0 : i32
    %c0_i32_0 = arith.constant 0 : i32
    %c0_i32_1 = arith.constant 0 : i32
    return %arg0, %c0_i32, %c0_i32_0 : i32, i32, i32
  }
}

module attributes {stable_mosaic.version = 11 : i64} {
  func.func @_scale_shift_act_kernel(%arg0: i32, %arg1: memref<16x128xbf16, #tpu.memory_space<vmem>>, %arg2: memref<1x128xf32, #tpu.memory_space<vmem>>, %arg3: memref<1x128xf32, #tpu.memory_space<vmem>>, %arg4: memref<16x128xbf16, #tpu.memory_space<vmem>>) attributes {dimension_semantics = [#tpu.dimension_semantics<parallel>], iteration_bounds = array<i64: 2>, scalar_prefetch = 0 : i64, scratch_operands = 0 : i64, tpu.core_type = #tpu.core_type<tc>, window_params = [{transform_indices = @transform_0, window_bounds = array<i64: 16, 128>}, {pipeline_mode = #tpu.pipeline_mode<synchronous>, transform_indices = @transform_1, window_bounds = array<i64: 1, 128>}, {pipeline_mode = #tpu.pipeline_mode<synchronous>, transform_indices = @transform_2, window_bounds = array<i64: 1, 128>}, {transform_indices = @transform_3, window_bounds = array<i64: 16, 128>}]} {
    %c0 = arith.constant 0 : index
    %c0_0 = arith.constant 0 : index
    %0 = vector.load %arg1[%c0, %c0_0] : memref<16x128xbf16, #tpu.memory_space<vmem>>, vector<16x128xbf16>
    %1 = arith.extf %0 : vector<16x128xbf16> to vector<16x128xf32>
    %c0_1 = arith.constant 0 : index
    %c0_2 = arith.constant 0 : index
    %2 = vector.load %arg2[%c0_1, %c0_2] : memref<1x128xf32, #tpu.memory_space<vmem>>, vector<1x128xf32>
    %3 = vector.broadcast %2 : vector<1x128xf32> to vector<16x128xf32>
    %4 = arith.mulf %1, %3 : vector<16x128xf32>
    %c0_3 = arith.constant 0 : index
    %c0_4 = arith.constant 0 : index
    %5 = vector.load %arg3[%c0_3, %c0_4] : memref<1x128xf32, #tpu.memory_space<vmem>>, vector<1x128xf32>
    %6 = vector.broadcast %5 : vector<1x128xf32> to vector<16x128xf32>
    %7 = arith.addf %4, %6 : vector<16x128xf32>
    %cst = arith.constant 0.000000e+00 : f32
    %8 = vector.broadcast %cst : f32 to vector<16x128xf32>
    %9 = arith.maximumf %7, %8 : vector<16x128xf32>
    %10 = arith.truncf %9 : vector<16x128xf32> to vector<16x128xbf16>
    %c0_5 = arith.constant 0 : index
    %c0_6 = arith.constant 0 : index
    %11 = vector.load %arg4[%c0_5, %c0_6] : memref<16x128xbf16, #tpu.memory_space<vmem>>, vector<16x128xbf16>
    tpu.vector_store %arg4[%c0_5, %c0_6], %10 {strides = array<i32>} : memref<16x128xbf16, #tpu.memory_space<vmem>>, vector<16x128xbf16>,
    return
  }
  func.func @transform_0(%arg0: i32) -> (i32, i32) {
    %c0_i32 = arith.constant 0 : i32
    %c0_i32_0 = arith.constant 0 : i32
    return %arg0, %c0_i32 : i32, i32
  }
  func.func @transform_1(%arg0: i32) -> (i32, i32) {
    %c0_i32 = arith.constant 0 : i32
    %c0_i32_0 = arith.constant 0 : i32
    %c0_i32_1 = arith.constant 0 : i32
    return %c0_i32, %c0_i32_0 : i32, i32
  }
  func.func @transform_2(%arg0: i32) -> (i32, i32) {
    %c0_i32 = arith.constant 0 : i32
    %c0_i32_0 = arith.constant 0 : i32
    %c0_i32_1 = arith.constant 0 : i32
    return %c0_i32, %c0_i32_0 : i32, i32
  }
  func.func @transform_3(%arg0: i32) -> (i32, i32) {
    %c0_i32 = arith.constant 0 : i32
    %c0_i32_0 = arith.constant 0 : i32
    return %arg0, %c0_i32 : i32, i32
  }
}

module attributes {stable_mosaic.version = 11 : i64} {
  func.func @_matmul_stats_kernel(%arg0: i32, %arg1: memref<64x144xbf16, #tpu.memory_space<vmem>>, %arg2: memref<144x128xbf16, #tpu.memory_space<vmem>>, %arg3: memref<1x2x128xf32, #tpu.memory_space<vmem>>) attributes {dimension_semantics = [#tpu.dimension_semantics<parallel>], iteration_bounds = array<i64: 2>, scalar_prefetch = 0 : i64, scratch_operands = 0 : i64, tpu.core_type = #tpu.core_type<tc>, window_params = [{transform_indices = @transform_0, window_bounds = array<i64: 64, 144>}, {pipeline_mode = #tpu.pipeline_mode<synchronous>, transform_indices = @transform_1, window_bounds = array<i64: 144, 128>}, {transform_indices = @transform_2, window_bounds = array<i64: 1, 2, 128>}]} {
    %c0 = arith.constant 0 : index
    %c0_0 = arith.constant 0 : index
    %0 = vector.load %arg1[%c0, %c0_0] : memref<64x144xbf16, #tpu.memory_space<vmem>>, vector<64x144xbf16>
    %c0_1 = arith.constant 0 : index
    %c0_2 = arith.constant 0 : index
    %1 = vector.load %arg2[%c0_1, %c0_2] : memref<144x128xbf16, #tpu.memory_space<vmem>>, vector<144x128xbf16>
    %cst = arith.constant dense<0.000000e+00> : vector<64x128xf32>
    %2 = tpu.matmul %0, %1, %cst {dimension_numbers = #tpu.dot_dimension_numbers<[1], [0], [0], [1], [0, 0, 1, 1], [], []>} : vector<64x144xbf16>, vector<144x128xbf16>, vector<64x128xf32> -> vector<64x128xf32>
    %cst_3 = arith.constant dense<0.000000e+00> : vector<128xf32>
    %3 = vector.multi_reduction <add>, %2, %cst_3 [0] : vector<64x128xf32> to vector<128xf32>
    %4 = vector.shape_cast %3 : vector<128xf32> to vector<1x128xf32>
    %5 = arith.mulf %2, %2 : vector<64x128xf32>
    %cst_4 = arith.constant dense<0.000000e+00> : vector<128xf32>
    %6 = vector.multi_reduction <add>, %5, %cst_4 [0] : vector<64x128xf32> to vector<128xf32>
    %7 = vector.shape_cast %6 : vector<128xf32> to vector<1x128xf32>
    %8 = tpu.concatenate %4, %7 in 0 : vector<1x128xf32>, vector<1x128xf32> -> vector<2x128xf32>
    %9 = vector.shape_cast %8 : vector<2x128xf32> to vector<1x2x128xf32>
    %c0_5 = arith.constant 0 : index
    %c0_6 = arith.constant 0 : index
    %c0_7 = arith.constant 0 : index
    %10 = vector.load %arg3[%c0_5, %c0_6, %c0_7] : memref<1x2x128xf32, #tpu.memory_space<vmem>>, vector<1x2x128xf32>
    tpu.vector_store %arg3[%c0_5, %c0_6, %c0_7], %9 {strides = array<i32>} : memref<1x2x128xf32, #tpu.memory_space<vmem>>, vector<1x2x128xf32>,
    return
  }
  func.func @transform_0(%arg0: i32) -> (i32, i32) {
    %c0_i32 = arith.constant 0 : i32
    %c0_i32_0 = arith.constant 0 : i32
    return %arg0, %c0_i32 : i32, i32
  }
  func.func @transform_1(%arg0: i32) -> (i32, i32) {
    %c0_i32 = arith.constant 0 : i32
    %c0_i32_0 = arith.constant 0 : i32
    %c0_i32_1 = arith.constant 0 : i32
    return %c0_i32, %c0_i32_0 : i32, i32
  }
  func.func @transform_2(%arg0: i32) -> (i32, i32, i32) {
    %c0_i32 = arith.constant 0 : i32
    %c0_i32_0 = arith.constant 0 : i32
    %c0_i32_1 = arith.constant 0 : i32
    return %arg0, %c0_i32, %c0_i32_0 : i32, i32, i32
  }
}

module attributes {stable_mosaic.version = 11 : i64} {
  func.func @_matmul_bn_act_kernel(%arg0: i32, %arg1: memref<64x144xbf16, #tpu.memory_space<vmem>>, %arg2: memref<144x128xbf16, #tpu.memory_space<vmem>>, %arg3: memref<1x128xf32, #tpu.memory_space<vmem>>, %arg4: memref<1x128xf32, #tpu.memory_space<vmem>>, %arg5: memref<64x128xbf16, #tpu.memory_space<vmem>>) attributes {dimension_semantics = [#tpu.dimension_semantics<parallel>], iteration_bounds = array<i64: 2>, scalar_prefetch = 0 : i64, scratch_operands = 0 : i64, tpu.core_type = #tpu.core_type<tc>, window_params = [{transform_indices = @transform_0, window_bounds = array<i64: 64, 144>}, {pipeline_mode = #tpu.pipeline_mode<synchronous>, transform_indices = @transform_1, window_bounds = array<i64: 144, 128>}, {pipeline_mode = #tpu.pipeline_mode<synchronous>, transform_indices = @transform_2, window_bounds = array<i64: 1, 128>}, {pipeline_mode = #tpu.pipeline_mode<synchronous>, transform_indices = @transform_3, window_bounds = array<i64: 1, 128>}, {transform_indices = @transform_4, window_bounds = array<i64: 64, 128>}]} {
    %c0 = arith.constant 0 : index
    %c0_0 = arith.constant 0 : index
    %0 = vector.load %arg1[%c0, %c0_0] : memref<64x144xbf16, #tpu.memory_space<vmem>>, vector<64x144xbf16>
    %c0_1 = arith.constant 0 : index
    %c0_2 = arith.constant 0 : index
    %1 = vector.load %arg2[%c0_1, %c0_2] : memref<144x128xbf16, #tpu.memory_space<vmem>>, vector<144x128xbf16>
    %cst = arith.constant dense<0.000000e+00> : vector<64x128xf32>
    %2 = tpu.matmul %0, %1, %cst {dimension_numbers = #tpu.dot_dimension_numbers<[1], [0], [0], [1], [0, 0, 1, 1], [], []>} : vector<64x144xbf16>, vector<144x128xbf16>, vector<64x128xf32> -> vector<64x128xf32>
    %c0_3 = arith.constant 0 : index
    %c0_4 = arith.constant 0 : index
    %3 = vector.load %arg3[%c0_3, %c0_4] : memref<1x128xf32, #tpu.memory_space<vmem>>, vector<1x128xf32>
    %4 = vector.broadcast %3 : vector<1x128xf32> to vector<64x128xf32>
    %5 = arith.mulf %2, %4 : vector<64x128xf32>
    %c0_5 = arith.constant 0 : index
    %c0_6 = arith.constant 0 : index
    %6 = vector.load %arg4[%c0_5, %c0_6] : memref<1x128xf32, #tpu.memory_space<vmem>>, vector<1x128xf32>
    %7 = vector.broadcast %6 : vector<1x128xf32> to vector<64x128xf32>
    %8 = arith.addf %5, %7 : vector<64x128xf32>
    %cst_7 = arith.constant 0.000000e+00 : f32
    %9 = vector.broadcast %cst_7 : f32 to vector<64x128xf32>
    %10 = arith.cmpf ogt, %8, %9 : vector<64x128xf32>
    %cst_8 = arith.constant 2.000000e-01 : f32
    %11 = vector.broadcast %cst_8 : f32 to vector<64x128xf32>
    %12 = arith.mulf %11, %8 : vector<64x128xf32>
    %13 = arith.select %10, %8, %12 : vector<64x128xi1>, vector<64x128xf32>
    %14 = arith.truncf %13 : vector<64x128xf32> to vector<64x128xbf16>
    %c0_9 = arith.constant 0 : index
    %c0_10 = arith.constant 0 : index
    %15 = vector.load %arg5[%c0_9, %c0_10] : memref<64x128xbf16, #tpu.memory_space<vmem>>, vector<64x128xbf16>
    tpu.vector_store %arg5[%c0_9, %c0_10], %14 {strides = array<i32>} : memref<64x128xbf16, #tpu.memory_space<vmem>>, vector<64x128xbf16>,
    return
  }
  func.func @transform_0(%arg0: i32) -> (i32, i32) {
    %c0_i32 = arith.constant 0 : i32
    %c0_i32_0 = arith.constant 0 : i32
    return %arg0, %c0_i32 : i32, i32
  }
  func.func @transform_1(%arg0: i32) -> (i32, i32) {
    %c0_i32 = arith.constant 0 : i32
    %c0_i32_0 = arith.constant 0 : i32
    %c0_i32_1 = arith.constant 0 : i32
    return %c0_i32, %c0_i32_0 : i32, i32
  }
  func.func @transform_2(%arg0: i32) -> (i32, i32) {
    %c0_i32 = arith.constant 0 : i32
    %c0_i32_0 = arith.constant 0 : i32
    %c0_i32_1 = arith.constant 0 : i32
    return %c0_i32, %c0_i32_0 : i32, i32
  }
  func.func @transform_3(%arg0: i32) -> (i32, i32) {
    %c0_i32 = arith.constant 0 : i32
    %c0_i32_0 = arith.constant 0 : i32
    %c0_i32_1 = arith.constant 0 : i32
    return %c0_i32, %c0_i32_0 : i32, i32
  }
  func.func @transform_4(%arg0: i32) -> (i32, i32) {
    %c0_i32 = arith.constant 0 : i32
    %c0_i32_0 = arith.constant 0 : i32
    return %arg0, %c0_i32 : i32, i32
  }
}

module attributes {stable_mosaic.version = 11 : i64} {
  func.func @_matmul_act_kernel(%arg0: i32, %arg1: memref<64x144xbf16, #tpu.memory_space<vmem>>, %arg2: memref<144x128xbf16, #tpu.memory_space<vmem>>, %arg3: memref<64x128xbf16, #tpu.memory_space<vmem>>) attributes {dimension_semantics = [#tpu.dimension_semantics<parallel>], iteration_bounds = array<i64: 2>, scalar_prefetch = 0 : i64, scratch_operands = 0 : i64, tpu.core_type = #tpu.core_type<tc>, window_params = [{transform_indices = @transform_0, window_bounds = array<i64: 64, 144>}, {pipeline_mode = #tpu.pipeline_mode<synchronous>, transform_indices = @transform_1, window_bounds = array<i64: 144, 128>}, {transform_indices = @transform_2, window_bounds = array<i64: 64, 128>}]} {
    %c0 = arith.constant 0 : index
    %c0_0 = arith.constant 0 : index
    %0 = vector.load %arg1[%c0, %c0_0] : memref<64x144xbf16, #tpu.memory_space<vmem>>, vector<64x144xbf16>
    %c0_1 = arith.constant 0 : index
    %c0_2 = arith.constant 0 : index
    %1 = vector.load %arg2[%c0_1, %c0_2] : memref<144x128xbf16, #tpu.memory_space<vmem>>, vector<144x128xbf16>
    %cst = arith.constant dense<0.000000e+00> : vector<64x128xf32>
    %2 = tpu.matmul %0, %1, %cst {dimension_numbers = #tpu.dot_dimension_numbers<[1], [0], [0], [1], [0, 0, 1, 1], [], []>} : vector<64x144xbf16>, vector<144x128xbf16>, vector<64x128xf32> -> vector<64x128xf32>
    %3 = math.tanh %2 : vector<64x128xf32>
    %4 = arith.truncf %3 : vector<64x128xf32> to vector<64x128xbf16>
    %c0_3 = arith.constant 0 : index
    %c0_4 = arith.constant 0 : index
    %5 = vector.load %arg3[%c0_3, %c0_4] : memref<64x128xbf16, #tpu.memory_space<vmem>>, vector<64x128xbf16>
    tpu.vector_store %arg3[%c0_3, %c0_4], %4 {strides = array<i32>} : memref<64x128xbf16, #tpu.memory_space<vmem>>, vector<64x128xbf16>,
    return
  }
  func.func @transform_0(%arg0: i32) -> (i32, i32) {
    %c0_i32 = arith.constant 0 : i32
    %c0_i32_0 = arith.constant 0 : i32
    return %arg0, %c0_i32 : i32, i32
  }
  func.func @transform_1(%arg0: i32) -> (i32, i32) {
    %c0_i32 = arith.constant 0 : i32
    %c0_i32_0 = arith.constant 0 : i32
    %c0_i32_1 = arith.constant 0 : i32
    return %c0_i32, %c0_i32_0 : i32, i32
  }
  func.func @transform_2(%arg0: i32) -> (i32, i32) {
    %c0_i32 = arith.constant 0 : i32
    %c0_i32_0 = arith.constant 0 : i32
    return %arg0, %c0_i32 : i32, i32
  }
}

</mosaic_0001>

<llo_original>
// kernel: tile.18
$region0: #{tile.18}
  #allocation0 [shape = 's32[1]{0}', space=sflag, size = 0x4, scoped, tag = 'scoped memory for tile.18']
  %s0 = inlined_call_operand.vmem [shape: f32[16], index: 0, kind: input, shape index: {}]
  %s1 = inlined_call_operand.vmem [shape: f32[4,16], index: 1, kind: output, shape index: {}]
  // Predicated region
  $region2: #{tile.18} parent=0 // pred_check
    _
  $region3: #{tile.18} parent=0 // pred_check_branch
    %3 = sbr.rel (0) target = $region5
  $region4: #{tile.18} parent=0 // pred_region
    _
  $region5: #{tile.18} parent=0 // pred_fallthru
    _
  %v4 = vld [vmem:[%s0] ss:$0 sm:$0xff]
  %5 = vst [vmem:[%s1] sm:$0xf] %v4

// kernel: tile.19
$region0: #{tile.19}
  %s0 = inlined_call_operand.vmem [shape: f32[4,16], index: 0, kind: input, shape index: {}]
  %s1 = inlined_call_operand.vmem [shape: f32[64], index: 1, kind: output, shape index: {}]
  $region1: #{tile.19} parent=0
    #allocation0 [shape = 'u8[4096]{0}', space=vmem, size = 0x1000, scoped, tag = 'scoped mem for output reshape']
    #allocation1 [shape = 'u8[4096]{0}', space=vmem, size = 0x1000, scoped, tag = 'scoped mem for input reshape']
    %s3 = sshllo.u32 0, 4
    %v4 = vld [vmem:[%s0] sm:%s3]
    %5 = vst [vmem:[#allocation1] sm:%s3] %v4
    %v6 = vld [vmem:[#allocation1] sm:$0x1]
    %vm7 = vcmask 130048
    %8 = vst.msk [vmem:[#allocation0] sm:$0x1] %vm7, %v6
    %s9 = scalar_lea.vmem [#allocation1], 3
    %v10 = vld [vmem:[%s9] sm:$0x1]
    %11 = vrot.lane.b32.xlu0 %v10, 48
    %v12 = vpop.permute.xlu0 %11
    %vm13 = vcmask 523648
    %14 = vst.msk [vmem:[#allocation0] sm:$0x1] %vm13, %v12
    %s15 = scalar_lea.vmem [#allocation1], 2
    %v16 = vld [vmem:[%s15] sm:$0x1]
    %17 = vrot.lane.b32.xlu0 %v16, 32
    %v18 = vpop.permute.xlu0 %17
    %vm19 = vcmask 392448
    %20 = vst.msk [vmem:[#allocation0] sm:$0x1] %vm19, %v18
    %s21 = scalar_lea.vmem [#allocation1], 1
    %v22 = vld [vmem:[%s21] sm:$0x1]
    %23 = vrot.lane.b32.xlu0 %v22, 16
    %v24 = vpop.permute.xlu0 %23
    %vm25 = vcmask 261248
    %26 = vst.msk [vmem:[#allocation0] sm:$0x1] %vm25, %v24
    %s28 = sshllo.u32 0, 1
    %v30 = vld [vmem:[#allocation0] sm:%s28]
    %s31 = sshllo.u32 0, 1
    %32 = vst [vmem:[%s1] sm:%s31] %v30

// kernel: decoder_forward.6
$region0: #{decoder_forward.6}
  #allocation0 [shape = 'u32[]', space=smem, size = 0x4, offset = 0x4, fixed_abs, tag = 'smem constant byte address 0x4 - core index']
  #allocation1 [shape = 'u32[144,128]{1,0:T(1,128)}', space=vmem, size = 0x12000, scoped, tag = 'internal scratch']
  %s0 = inlined_call_operand.vmem [shape: bf16[32,128], index: 0, kind: input, shape index: {}]
  %s1 = inlined_call_operand.vmem [shape: f32[1,128], index: 1, kind: input, shape index: {}]
  %s2 = inlined_call_operand.vmem [shape: f32[1,128], index: 2, kind: input, shape index: {}]
  %s3 = inlined_call_operand.vmem [shape: bf16[32,128], index: 3, kind: output, shape index: {}]
  %s4 = sld [smem:[#allocation0]]
  $region45: #{decoder_forward.6} parent=0
    _
  %s6 = ssub.s32 1, %s4
  %s7 = scalar_select 0, %s6, %s4
  loop: start=0, step=1, limit=4
  $region2: #{decoder_forward.6} parent=0 // loop_pre_header
    _
  $region3: #{decoder_forward.6} parent=0 // loop_header
    %s9 = sphi 0, %s13
    %p10 = scmp.ge.s32.totalorder %s9, 4
    %s19 = sphi 0, %s21
    %s22 = sphi 0, %s19
    %s23 = sphi 0, %s22
    %s39 = sphi 0, %s23
    %s43 = sphi 0, %s43
    %s45 = sphi 0, %s43
    %s46 = sphi 0, %s45
    %s60 = sphi 0, %s46
    %s64 = sphi 0, %s64
    %s66 = sphi 0, %s64
    %s67 = sphi 0, %s66
    %s81 = sphi 0, %s67
    %s87 = sphi 0, %s89
    %s90 = sphi 0, %s87
    %s91 = sphi 0, %s90
    %s107 = sphi 0, %s91
  $region4: #{decoder_forward.6} parent=0 // loop_header_branch
    %12 = sbr.rel (%p10) target = $region8
  $region5: #{decoder_forward.6} parent=0 // loop_body
    %s14 = ssub.s32 %s9, 1
    %s15 = ssub.s32 %s9, 2
    %s16 = sadd.s32 %s9, 1
    %s17 = ssub.s32 %s9, %s16
    %p18 = scmp.eq.s32.totalorder %s17, 0
    %s20 = sadd.s32 %s19, 1
    %s21 = scalar_select %p18, %s19, %s20
    %p24 = pneg %p18
    %p25 = scmp.eq.s32.totalorder %s9, 1
    %p26 = por %p24, %p25
    %p27 = scmp.ne.s32.totalorder %s19, %s22
    %p28 = scmp.eq.s32.totalorder %s9, 0
    %p29 = por %p27, %p28
    %p30 = scmp.ne.s32.totalorder %s19, %s22
    %p31 = scmp.eq.s32.totalorder %s14, 1
    %p32 = por %p30, %p31
    %p33 = scmp.ne.s32.totalorder %s22, %s23
    %p34 = scmp.eq.s32.totalorder %s14, 0
    %p35 = por %p33, %p34
    %p36 = scmp.ne.s32.totalorder %s22, %s23
    %p37 = scmp.eq.s32.totalorder %s15, 1
    %p38 = por %p36, %p37
    %p40 = scmp.ne.s32.totalorder %s23, %s39
    %p41 = scmp.eq.s32.totalorder %s15, 0
    %p42 = por %p40, %p41
    %s44 = sadd.s32 %s43, 1
    %p47 = scmp.eq.s32.totalorder %s9, 1
    %p48 = scmp.ne.s32.totalorder %s43, %s45
    %p49 = scmp.eq.s32.totalorder %s9, 0
    %p50 = por %p48, %p49
    %p51 = scmp.ne.s32.totalorder %s43, %s45
    %p52 = scmp.eq.s32.totalorder %s14, 1
    %p53 = por %p51, %p52
    %p54 = scmp.ne.s32.totalorder %s45, %s46
    %p55 = scmp.eq.s32.totalorder %s14, 0
    %p56 = por %p54, %p55
    %p57 = scmp.ne.s32.totalorder %s45, %s46
    %p58 = scmp.eq.s32.totalorder %s15, 1
    %p59 = por %p57, %p58
    %p61 = scmp.ne.s32.totalorder %s46, %s60
    %p62 = scmp.eq.s32.totalorder %s15, 0
    %p63 = por %p61, %p62
    %s65 = sadd.s32 %s64, 1
    %p68 = scmp.eq.s32.totalorder %s9, 1
    %p69 = scmp.ne.s32.totalorder %s64, %s66
    %p70 = scmp.eq.s32.totalorder %s9, 0
    %p71 = por %p69, %p70
    %p72 = scmp.ne.s32.totalorder %s64, %s66
    %p73 = scmp.eq.s32.totalorder %s14, 1
    %p74 = por %p72, %p73
    %p75 = scmp.ne.s32.totalorder %s66, %s67
    %p76 = scmp.eq.s32.totalorder %s14, 0
    %p77 = por %p75, %p76
    %p78 = scmp.ne.s32.totalorder %s66, %s67
    %p79 = scmp.eq.s32.totalorder %s15, 1
    %p80 = por %p78, %p79
    %p82 = scmp.ne.s32.totalorder %s67, %s81
    %p83 = scmp.eq.s32.totalorder %s15, 0
    %p84 = por %p82, %p83
    %s85 = ssub.s32 %s9, %s16
    %p86 = scmp.eq.s32.totalorder %s85, 0
    %s88 = sadd.s32 %s87, 1
    %s89 = scalar_select %p86, %s87, %s88
    %p92 = pneg %p86
    %p93 = scmp.eq.s32.totalorder %s9, 1
    %p94 = por %p92, %p93
    %p95 = scmp.ne.s32.totalorder %s87, %s90
    %p96 = scmp.eq.s32.totalorder %s9, 0
    %p97 = por %p95, %p96
    %p98 = scmp.ne.s32.totalorder %s87, %s90
    %p99 = scmp.eq.s32.totalorder %s14, 1
    %p100 = por %p98, %p99
    %p101 = scmp.ne.s32.totalorder %s90, %s91
    %p102 = scmp.eq.s32.totalorder %s14, 0
    %p103 = por %p101, %p102
    %p104 = scmp.ne.s32.totalorder %s90, %s91
    %p105 = scmp.eq.s32.totalorder %s15, 1
    %p106 = por %p104, %p105
    %p108 = scmp.ne.s32.totalorder %s91, %s107
    %p109 = scmp.eq.s32.totalorder %s15, 0
    %p110 = por %p108, %p109
    %p111 = scmp.le.s32.totalorder 1, %s9
    %p112 = scmp.lt.s32.totalorder %s9, 3
    %p113 = pnand %p111, %p112
    %p114 = pneg %p113
    // Predicated region
    $region9: #{decoder_forward.6} parent=5 // pred_check
      _
    $region10: #{decoder_forward.6} parent=5 // pred_check_branch
      %116 = sbr.rel (%p113) target = $region12
    $region11: #{decoder_forward.6} parent=5 // pred_region
      %s117 = ssub.s32 %s9, 1
      // Predicated region
      $region13: #{decoder_forward.6} parent=11 // pred_check
        %p118 = pneg %p56
      $region14: #{decoder_forward.6} parent=11 // pred_check_branch
        %120 = sbr.rel (%p118) target = $region16
      $region15: #{decoder_forward.6} parent=11 // pred_region
        _
      $region16: #{decoder_forward.6} parent=11 // pred_fallthru
        _
      // Predicated region
      $region17: #{decoder_forward.6} parent=11 // pred_check
        %p121 = pneg %p77
      $region18: #{decoder_forward.6} parent=11 // pred_check_branch
        %123 = sbr.rel (%p121) target = $region20
      $region19: #{decoder_forward.6} parent=11 // pred_region
        _
      $region20: #{decoder_forward.6} parent=11 // pred_fallthru
        _
    $region12: #{decoder_forward.6} parent=5 // pred_fallthru
      _
    %p124 = scmp.lt.s32.totalorder %s9, 2
    // Predicated region
    $region21: #{decoder_forward.6} parent=5 // pred_check
      %p125 = pneg %p124
    $region22: #{decoder_forward.6} parent=5 // pred_check_branch
      %127 = sbr.rel (%p125) target = $region24
    $region23: #{decoder_forward.6} parent=5 // pred_region
      // Predicated region
      $region25: #{decoder_forward.6} parent=23 // pred_check
        %p128 = pneg %p29
      $region26: #{decoder_forward.6} parent=23 // pred_check_branch
        %130 = sbr.rel (%p128) target = $region28
      $region27: #{decoder_forward.6} parent=23 // pred_region
        %s131 = smul.u32 2, %s9
        %p132 = scmp.lt.s32.totalorder %s131, 3
        %s133 = scalar_select %p132, %s131, 3
        %s134 = smul.addr %s133, 4
        %s135 = scalar_lea.vmem %s0, %s134
        %s136 = smul.u32 2, %s9
      $region28: #{decoder_forward.6} parent=23 // pred_fallthru
        _
    $region24: #{decoder_forward.6} parent=5 // pred_fallthru
      _
    %p137 = scmp.le.s32.totalorder 1, %s9
    %p138 = scmp.lt.s32.totalorder %s9, 3
    %p139 = pnand %p137, %p138
    %p140 = pneg %p139
    // Predicated region
    $region29: #{decoder_forward.6} parent=5 // pred_check
      _
    $region30: #{decoder_forward.6} parent=5 // pred_check_branch
      %142 = sbr.rel (%p139) target = $region32
    $region31: #{decoder_forward.6} parent=5 // pred_region
      %s143 = ssub.s32 %s9, 1
      %s144 = smul.u32 2, %s14
      %p145 = scmp.lt.s32.totalorder %s144, 3
      %s146 = scalar_select %p145, %s144, 3
      %s147 = smul.addr %s146, 4
      %s148 = scalar_lea.vmem %s0, %s147
      %p149 = pneg %p35
      %p150 = pneg %p32
      %p151 = pneg %p56
      %p152 = pneg %p53
      %p153 = pneg %p77
      %p154 = pneg %p74
      %p155 = pneg %p103
      %p156 = pneg %p100
      %s157 = smul.u32 2, %s14
      %p158 = scmp.lt.s32.totalorder %s157, 3
      %s159 = scalar_select %p158, %s157, 3
      %s160 = smul.addr %s159, 4
      %s161 = scalar_lea.vmem %s3, %s160
      %s162 = smul.u32 2, %s14
      %p163 = scmp.lt.s32.totalorder %s162, 3
      %s164 = scalar_select %p163, %s162, 3
      %s165 = smul.addr %s164, 4
      %s166 = scalar_lea.vmem %s0, %s165
      %s167 = smul.u32 2, %s14
      %s168 = smul.u32 2, %s14
      %p169 = scmp.lt.s32.totalorder %s168, 3
      %s170 = scalar_select %p169, %s168, 3
      %s171 = smul.addr %s170, 4
      %s172 = scalar_lea.vmem %s3, %s171
      %s173 = smul.u32 2, %s14
      %v174 = vld [vmem:[%s166] sm:$0xf]
      %v175 = vld [vmem:[%s166 + $0x4] sm:$0xf]
      %v176 = vunpack.c.l.bf16 %v174
      %v177 = vunpack.c.l.bf16 %v175
      %v178 = vld [vmem:[%s1] sm:$0x1]
      %v180 = vlaneseq
      %v181 = vshrl.u32 %v180, 7
      %v182 = vsub.s32 0, %v181
      %v183 = vrot.slane %v178, %v182
      %v185 = vmul.f32 %v176, %v183
      %v186 = vmul.f32 %v177, %v183
      %v187 = vld [vmem:[%s2] sm:$0x1]
      %v189 = vlaneseq
      %v190 = vshrl.u32 %v189, 7
      %v191 = vsub.s32 0, %v190
      %v192 = vrot.slane %v187, %v191
      %v194 = vadd.f32 %v185, %v192
      %v195 = vadd.f32 %v186, %v192
      %v196 = vmax.f32 %v194, 0.0
      %v197 = vmax.f32 %v195, 0.0
      %v198 = vpack.c.bf16 %v197, %v196
      %v200 = vunpack.c.l.b16 %v198
      %v201 = vunpack.c.h.b16 %v198
      %v202 = vpack.c.b16 %v200, %v200
      %v203 = vpack.c.b16 %v201, %v201
      %206 = vst [vmem:[%s172] sm:$0xf] %v202
      %207 = vst [vmem:[%s172 + $0x4] sm:$0xf] %v203
      %s208 = smul.u32 2, %s14
      %p209 = scmp.lt.s32.totalorder %s208, 3
      %s210 = scalar_select %p209, %s208, 3
      %s211 = smul.addr %s210, 4
      %s212 = scalar_lea.vmem %s3, %s211
      // Predicated region
      $region33: #{decoder_forward.6} parent=31 // pred_check
        %p213 = pneg %p100
      $region34: #{decoder_forward.6} parent=31 // pred_check_branch
        %215 = sbr.rel (%p213) target = $region36
      $region35: #{decoder_forward.6} parent=31 // pred_region
        %s216 = smul.u32 2, %s14
      $region36: #{decoder_forward.6} parent=31 // pred_fallthru
        _
    $region32: #{decoder_forward.6} parent=5 // pred_fallthru
      _
    %p217 = scmp.le.s32.totalorder 2, %s9
    // Predicated region
    $region37: #{decoder_forward.6} parent=5 // pred_check
      %p218 = pneg %p217
    $region38: #{decoder_forward.6} parent=5 // pred_check_branch
      %220 = sbr.rel (%p218) target = $region40
    $region39: #{decoder_forward.6} parent=5 // pred_region
      %s221 = ssub.s32 %s9, 2
      // Predicated region
      $region41: #{decoder_forward.6} parent=39 // pred_check
        %p222 = pneg %p106
      $region42: #{decoder_forward.6} parent=39 // pred_check_branch
        %224 = sbr.rel (%p222) target = $region44
      $region43: #{decoder_forward.6} parent=39 // pred_region
        %s225 = smul.u32 2, %s15
        %p226 = scmp.lt.s32.totalorder %s225, 3
        %s227 = scalar_select %p226, %s225, 3
        %s228 = smul.addr %s227, 4
        %s229 = scalar_lea.vmem %s3, %s228
      $region44: #{decoder_forward.6} parent=39 // pred_fallthru
        _
    $region40: #{decoder_forward.6} parent=5 // pred_fallthru
      _
  $region6: #{decoder_forward.6} parent=0 // loop_footer
    %s13 = sadd.s32 1, %s9
  $region7: #{decoder_forward.6} parent=0 // loop_footer_branch
    %8 = sbr.rel target = $region3
  $region8: #{decoder_forward.6} parent=0 // loop_exit
    _

// kernel: decoder_forward.5
$region0: #{decoder_forward.5}
  #allocation0 [shape = 'u32[]', space=smem, size = 0x4, offset = 0x4, fixed_abs, tag = 'smem constant byte address 0x4 - core index']
  #allocation1 [shape = 'u32[144,128]{1,0:T(1,128)}', space=vmem, size = 0x12000, scoped, tag = 'internal scratch']
  %s0 = inlined_call_operand.vmem [shape: bf16[32,288], index: 0, kind: input, shape index: {}]
  %s1 = inlined_call_operand.vmem [shape: bf16[288,128], index: 1, kind: input, shape index: {}]
  %s2 = inlined_call_operand.vmem [shape: bf16[32,128], index: 2, kind: output, shape index: {0}]
  %s3 = inlined_call_operand.vmem [shape: f32[2,2,128], index: 3, kind: output, shape index: {1}]
  %4 = xla_tuple %s2, %s3
  %s5 = sld [smem:[#allocation0]]
  $region49: #{decoder_forward.5} parent=0
    _
  %s7 = ssub.s32 1, %s5
  %s8 = scalar_select 0, %s7, %s5
  loop: start=0, step=1, limit=4
  $region2: #{decoder_forward.5} parent=0 // loop_pre_header
    _
  $region3: #{decoder_forward.5} parent=0 // loop_header
    %s10 = sphi 0, %s14
    %p11 = scmp.ge.s32.totalorder %s10, 4
    %s20 = sphi 0, %s22
    %s23 = sphi 0, %s20
    %s24 = sphi 0, %s23
    %s40 = sphi 0, %s24
    %s44 = sphi 0, %s44
    %s46 = sphi 0, %s44
    %s47 = sphi 0, %s46
    %s61 = sphi 0, %s47
    %s67 = sphi 0, %s69
    %s70 = sphi 0, %s67
    %s71 = sphi 0, %s70
    %s87 = sphi 0, %s71
    %s93 = sphi 0, %s95
    %s96 = sphi 0, %s93
    %s97 = sphi 0, %s96
    %s113 = sphi 0, %s97
  $region4: #{decoder_forward.5} parent=0 // loop_header_branch
    %13 = sbr.rel (%p11) target = $region8
  $region5: #{decoder_forward.5} parent=0 // loop_body
    %s15 = ssub.s32 %s10, 1
    %s16 = ssub.s32 %s10, 2
    %s17 = sadd.s32 %s10, 1
    %s18 = ssub.s32 %s10, %s17
    %p19 = scmp.eq.s32.totalorder %s18, 0
    %s21 = sadd.s32 %s20, 1
    %s22 = scalar_select %p19, %s20, %s21
    %p25 = pneg %p19
    %p26 = scmp.eq.s32.totalorder %s10, 1
    %p27 = por %p25, %p26
    %p28 = scmp.ne.s32.totalorder %s20, %s23
    %p29 = scmp.eq.s32.totalorder %s10, 0
    %p30 = por %p28, %p29
    %p31 = scmp.ne.s32.totalorder %s20, %s23
    %p32 = scmp.eq.s32.totalorder %s15, 1
    %p33 = por %p31, %p32
    %p34 = scmp.ne.s32.totalorder %s23, %s24
    %p35 = scmp.eq.s32.totalorder %s15, 0
    %p36 = por %p34, %p35
    %p37 = scmp.ne.s32.totalorder %s23, %s24
    %p38 = scmp.eq.s32.totalorder %s16, 1
    %p39 = por %p37, %p38
    %p41 = scmp.ne.s32.totalorder %s24, %s40
    %p42 = scmp.eq.s32.totalorder %s16, 0
    %p43 = por %p41, %p42
    %s45 = sadd.s32 %s44, 1
    %p48 = scmp.eq.s32.totalorder %s10, 1
    %p49 = scmp.ne.s32.totalorder %s44, %s46
    %p50 = scmp.eq.s32.totalorder %s10, 0
    %p51 = por %p49, %p50
    %p52 = scmp.ne.s32.totalorder %s44, %s46
    %p53 = scmp.eq.s32.totalorder %s15, 1
    %p54 = por %p52, %p53
    %p55 = scmp.ne.s32.totalorder %s46, %s47
    %p56 = scmp.eq.s32.totalorder %s15, 0
    %p57 = por %p55, %p56
    %p58 = scmp.ne.s32.totalorder %s46, %s47
    %p59 = scmp.eq.s32.totalorder %s16, 1
    %p60 = por %p58, %p59
    %p62 = scmp.ne.s32.totalorder %s47, %s61
    %p63 = scmp.eq.s32.totalorder %s16, 0
    %p64 = por %p62, %p63
    %s65 = ssub.s32 %s10, %s17
    %p66 = scmp.eq.s32.totalorder %s65, 0
    %s68 = sadd.s32 %s67, 1
    %s69 = scalar_select %p66, %s67, %s68
    %p72 = pneg %p66
    %p73 = scmp.eq.s32.totalorder %s10, 1
    %p74 = por %p72, %p73
    %p75 = scmp.ne.s32.totalorder %s67, %s70
    %p76 = scmp.eq.s32.totalorder %s10, 0
    %p77 = por %p75, %p76
    %p78 = scmp.ne.s32.totalorder %s67, %s70
    %p79 = scmp.eq.s32.totalorder %s15, 1
    %p80 = por %p78, %p79
    %p81 = scmp.ne.s32.totalorder %s70, %s71
    %p82 = scmp.eq.s32.totalorder %s15, 0
    %p83 = por %p81, %p82
    %p84 = scmp.ne.s32.totalorder %s70, %s71
    %p85 = scmp.eq.s32.totalorder %s16, 1
    %p86 = por %p84, %p85
    %p88 = scmp.ne.s32.totalorder %s71, %s87
    %p89 = scmp.eq.s32.totalorder %s16, 0
    %p90 = por %p88, %p89
    %s91 = ssub.s32 %s10, %s17
    %p92 = scmp.eq.s32.totalorder %s91, 0
    %s94 = sadd.s32 %s93, 1
    %s95 = scalar_select %p92, %s93, %s94
    %p98 = pneg %p92
    %p99 = scmp.eq.s32.totalorder %s10, 1
    %p100 = por %p98, %p99
    %p101 = scmp.ne.s32.totalorder %s93, %s96
    %p102 = scmp.eq.s32.totalorder %s10, 0
    %p103 = por %p101, %p102
    %p104 = scmp.ne.s32.totalorder %s93, %s96
    %p105 = scmp.eq.s32.totalorder %s15, 1
    %p106 = por %p104, %p105
    %p107 = scmp.ne.s32.totalorder %s96, %s97
    %p108 = scmp.eq.s32.totalorder %s15, 0
    %p109 = por %p107, %p108
    %p110 = scmp.ne.s32.totalorder %s96, %s97
    %p111 = scmp.eq.s32.totalorder %s16, 1
    %p112 = por %p110, %p111
    %p114 = scmp.ne.s32.totalorder %s97, %s113
    %p115 = scmp.eq.s32.totalorder %s16, 0
    %p116 = por %p114, %p115
    %p117 = scmp.le.s32.totalorder 1, %s10
    %p118 = scmp.lt.s32.totalorder %s10, 3
    %p119 = pnand %p117, %p118
    %p120 = pneg %p119
    // Predicated region
    $region9: #{decoder_forward.5} parent=5 // pred_check
      _
    $region10: #{decoder_forward.5} parent=5 // pred_check_branch
      %122 = sbr.rel (%p119) target = $region12
    $region11: #{decoder_forward.5} parent=5 // pred_region
      %s123 = ssub.s32 %s10, 1
      // Predicated region
      $region13: #{decoder_forward.5} parent=11 // pred_check
        %p124 = pneg %p57
      $region14: #{decoder_forward.5} parent=11 // pred_check_branch
        %126 = sbr.rel (%p124) target = $region16
      $region15: #{decoder_forward.5} parent=11 // pred_region
        _
      $region16: #{decoder_forward.5} parent=11 // pred_fallthru
        _
    $region12: #{decoder_forward.5} parent=5 // pred_fallthru
      _
    %p127 = scmp.lt.s32.totalorder %s10, 2
    // Predicated region
    $region17: #{decoder_forward.5} parent=5 // pred_check
      %p128 = pneg %p127
    $region18: #{decoder_forward.5} parent=5 // pred_check_branch
      %130 = sbr.rel (%p128) target = $region20
    $region19: #{decoder_forward.5} parent=5 // pred_region
      // Predicated region
      $region21: #{decoder_forward.5} parent=19 // pred_check
        %p131 = pneg %p30
      $region22: #{decoder_forward.5} parent=19 // pred_check_branch
        %133 = sbr.rel (%p131) target = $region24
      $region23: #{decoder_forward.5} parent=19 // pred_region
        %s134 = smul.u32 2, %s10
        %p135 = scmp.lt.s32.totalorder %s134, 3
        %s136 = scalar_select %p135, %s134, 3
        %s137 = smul.addr %s136, 3
        %s138 = smul.addr %s137, 4
        %s139 = scalar_lea.vmem %s0, %s138
        %s140 = smul.u32 2, %s10
      $region24: #{decoder_forward.5} parent=19 // pred_fallthru
        _
    $region20: #{decoder_forward.5} parent=5 // pred_fallthru
      _
    %p141 = scmp.le.s32.totalorder 1, %s10
    %p142 = scmp.lt.s32.totalorder %s10, 3
    %p143 = pnand %p141, %p142
    %p144 = pneg %p143
    // Predicated region
    $region25: #{decoder_forward.5} parent=5 // pred_check
      _
    $region26: #{decoder_forward.5} parent=5 // pred_check_branch
      %146 = sbr.rel (%p143) target = $region28
    $region27: #{decoder_forward.5} parent=5 // pred_region
      %s147 = ssub.s32 %s10, 1
      %s148 = smul.u32 2, %s15
      %p149 = scmp.lt.s32.totalorder %s148, 3
      %s150 = scalar_select %p149, %s148, 3
      %s151 = smul.addr %s150, 3
      %s152 = smul.addr %s151, 4
      %s153 = scalar_lea.vmem %s0, %s152
      %p154 = pneg %p36
      %p155 = pneg %p33
      %p156 = pneg %p57
      %p157 = pneg %p54
      %p158 = pneg %p83
      %p159 = pneg %p80
      %s160 = smul.u32 2, %s15
      %p161 = scmp.lt.s32.totalorder %s160, 3
      %s162 = scalar_select %p161, %s160, 3
      %s163 = smul.addr %s162, 4
      %s164 = scalar_lea.vmem %s2, %s163
      %p165 = pneg %p109
      %p166 = pneg %p106
      %p167 = scmp.lt.s32.totalorder %s15, 1
      %s168 = scalar_select %p167, %s15, 1
      %s169 = smul.addr %s168, 2
      %s170 = scalar_lea.vmem %s3, %s169
      %s171 = smul.u32 2, %s15
      %p172 = scmp.lt.s32.totalorder %s171, 3
      %s173 = scalar_select %p172, %s171, 3
      %s174 = smul.addr %s173, 3
      %s175 = smul.addr %s174, 4
      %s176 = scalar_lea.vmem %s0, %s175
      %s177 = smul.u32 2, %s15
      %s178 = smul.u32 2, %s15
      %p179 = scmp.lt.s32.totalorder %s178, 3
      %s180 = scalar_select %p179, %s178, 3
      %s181 = smul.addr %s180, 4
      %s182 = scalar_lea.vmem %s2, %s181
      %s183 = smul.u32 2, %s15
      %p184 = scmp.lt.s32.totalorder %s15, 1
      %s185 = scalar_select %p184, %s15, 1
      %s186 = smul.addr %s185, 2
      %s187 = scalar_lea.vmem %s3, %s186
      %v189 = vld [vmem:[%s176] sm:$0xff]
      %v190 = vld [vmem:[%s176 + $0x8] sm:$0xf]
      %v191 = vld [vmem:[%s176 + $0xc] sm:$0xff]
      %v192 = vld [vmem:[%s176 + $0x14] sm:$0xf]
      %v193 = vld [vmem:[%s1] sm:$0xf]
      %v194 = vld [vmem:[%s1 + $0x4] sm:$0xf]
      %v195 = vld [vmem:[%s1 + $0x8] sm:$0xf]
      %v196 = vld [vmem:[%s1 + $0xc] sm:$0xf]
      %v197 = vld [vmem:[%s1 + $0x10] sm:$0xf]
      %v198 = vld [vmem:[%s1 + $0x14] sm:$0xf]
      %v199 = vld [vmem:[%s1 + $0x18] sm:$0xf]
      %v200 = vld [vmem:[%s1 + $0x1c] sm:$0xf]
      %v201 = vld [vmem:[%s1 + $0x20] sm:$0xf]
      %v202 = vld [vmem:[%s1 + $0x24] sm:$0xf]
      %v203 = vld [vmem:[%s1 + $0x28] sm:$0xf]
      %v204 = vld [vmem:[%s1 + $0x2c] sm:$0xf]
      %v205 = vld [vmem:[%s1 + $0x30] sm:$0xf]
      %v206 = vld [vmem:[%s1 + $0x34] sm:$0xf]
      %v207 = vld [vmem:[%s1 + $0x38] sm:$0xf]
      %v208 = vld [vmem:[%s1 + $0x3c] sm:$0xf]
      %v209 = vld [vmem:[%s1 + $0x40] sm:$0xf]
      %v210 = vld [vmem:[%s1 + $0x44] sm:$0xf]
      %v211 = vld [vmem:[%s1 + $0x48] sm:$0xf]
      %v212 = vld [vmem:[%s1 + $0x4c] sm:$0xf]
      %v213 = vld [vmem:[%s1 + $0x50] sm:$0xf]
      %v214 = vld [vmem:[%s1 + $0x54] sm:$0xf]
      %v215 = vld [vmem:[%s1 + $0x58] sm:$0xf]
      %v216 = vld [vmem:[%s1 + $0x5c] sm:$0xf]
      %v217 = vld [vmem:[%s1 + $0x60] sm:$0xf]
      %v218 = vld [vmem:[%s1 + $0x64] sm:$0xf]
      %v219 = vld [vmem:[%s1 + $0x68] sm:$0xf]
      %v220 = vld [vmem:[%s1 + $0x6c] sm:$0xf]
      %v221 = vld [vmem:[%s1 + $0x70] sm:$0xf]
      %v222 = vld [vmem:[%s1 + $0x74] sm:$0xf]
      %v223 = vld [vmem:[%s1 + $0x78] sm:$0xf]
      %v224 = vld [vmem:[%s1 + $0x7c] sm:$0xf]
      %v225 = vld [vmem:[%s1 + $0x80] sm:$0xf]
      %v226 = vld [vmem:[%s1 + $0x84] sm:$0xf]
      %v227 = vld [vmem:[%s1 + $0x88] sm:$0xf]
      %v228 = vld [vmem:[%s1 + $0x8c] sm:$0xf]
      %v233 = vunpack.c.l.b16 %v189
      %v234 = vunpack.c.h.b16 %v189
      %v235 = vunpack.c.l.b16 %v190
      %v236 = vunpack.c.l.b16 %v191
      %v237 = vunpack.c.h.b16 %v191
      %v238 = vunpack.c.l.b16 %v192
      %v239 = vpack.c.b16 %v236, %v233
      %v240 = vpack.c.b16 %v237, %v234
      %v241 = vpack.c.b16 %v238, %v235
      %v280 = vunpack.c.l.b16 %v193
      %v281 = vunpack.c.l.b16 %v194
      %v282 = vunpack.c.l.b16 %v195
      %v283 = vunpack.c.l.b16 %v196
      %v284 = vunpack.c.l.b16 %v197
      %v285 = vunpack.c.l.b16 %v198
      %v286 = vunpack.c.l.b16 %v199
      %v287 = vunpack.c.l.b16 %v200
      %v288 = vunpack.c.l.b16 %v201
      %v289 = vunpack.c.l.b16 %v202
      %v290 = vunpack.c.l.b16 %v203
      %v291 = vunpack.c.l.b16 %v204
      %v292 = vunpack.c.l.b16 %v205
      %v293 = vunpack.c.l.b16 %v206
      %v294 = vunpack.c.l.b16 %v207
      %v295 = vunpack.c.l.b16 %v208
      %v296 = vunpack.c.l.b16 %v209
      %v297 = vunpack.c.l.b16 %v210
      %v298 = vunpack.c.l.b16 %v211
      %v299 = vunpack.c.l.b16 %v212
      %v300 = vunpack.c.l.b16 %v213
      %v301 = vunpack.c.l.b16 %v214
      %v302 = vunpack.c.l.b16 %v215
      %v303 = vunpack.c.l.b16 %v216
      %v304 = vunpack.c.l.b16 %v217
      %v305 = vunpack.c.l.b16 %v218
      %v306 = vunpack.c.l.b16 %v219
      %v307 = vunpack.c.l.b16 %v220
      %v308 = vunpack.c.l.b16 %v221
      %v309 = vunpack.c.l.b16 %v222
      %v310 = vunpack.c.l.b16 %v223
      %v311 = vunpack.c.l.b16 %v224
      %v312 = vunpack.c.l.b16 %v225
      %v313 = vunpack.c.l.b16 %v226
      %v314 = vunpack.c.l.b16 %v227
      %v315 = vunpack.c.l.b16 %v228
      %v316 = vpack.c.b16 %v281, %v280
      %v317 = vpack.c.b16 %v283, %v282
      %v318 = vpack.c.b16 %v285, %v284
      %v319 = vpack.c.b16 %v287, %v286
      %v320 = vpack.c.b16 %v289, %v288
      %v321 = vpack.c.b16 %v291, %v290
      %v322 = vpack.c.b16 %v293, %v292
      %v323 = vpack.c.b16 %v295, %v294
      %v324 = vpack.c.b16 %v297, %v296
      %v325 = vpack.c.b16 %v299, %v298
      %v326 = vpack.c.b16 %v301, %v300
      %v327 = vpack.c.b16 %v303, %v302
      %v328 = vpack.c.b16 %v305, %v304
      %v329 = vpack.c.b16 %v307, %v306
      %v330 = vpack.c.b16 %v309, %v308
      %v331 = vpack.c.b16 %v311, %v310
      %v332 = vpack.c.b16 %v313, %v312
      %v333 = vpack.c.b16 %v315, %v314
      %vm352 = vcmask 261120
      %v354 = vsel %vm352, %v241, 0
      %356 = vmatprep.subr.bf16.mxu0 0
      %357 = vmatpush1.bf16.msra.mxu0 %v316
      %358 = vmatprep.subr.bf16.mxu0 0
      %359 = vmatpush1.bf16.msra.mxu0 %v317
      %360 = vmatprep.subr.bf16.mxu0 0
      %361 = vmatpush1.bf16.msra.mxu0 %v318
      %362 = vmatprep.subr.bf16.mxu0 0
      %363 = vmatpush1.bf16.msra.mxu0 %v319
      %364 = vmatprep.subr.bf16.mxu0 0
      %365 = vmatpush1.bf16.msra.mxu0 %v320
      %366 = vmatprep.subr.bf16.mxu0 0
      %367 = vmatpush1.bf16.msra.mxu0 %v321
      %368 = vmatprep.subr.bf16.mxu0 0
      %369 = vmatpush1.bf16.msra.mxu0 %v322
      %370 = vmatprep.subr.bf16.mxu0 0
      %371 = vmatpush1.bf16.msra.mxu0 %v323
      %372 = vmatprep.subr.bf16.mxu0 0
      %373 = vmatpush1.bf16.msra.mxu0 %v324
      %374 = vmatprep.subr.bf16.mxu0 0
      %375 = vmatpush1.bf16.msra.mxu0 %v325
      %376 = vmatprep.subr.bf16.mxu0 0
      %377 = vmatpush1.bf16.msra.mxu0 %v326
      %378 = vmatprep.subr.bf16.mxu0 0
      %379 = vmatpush1.bf16.msra.mxu0 %v327
      %380 = vmatprep.subr.bf16.mxu0 0
      %381 = vmatpush1.bf16.msra.mxu0 %v328
      %382 = vmatprep.subr.bf16.mxu0 0
      %383 = vmatpush1.bf16.msra.mxu0 %v329
      %384 = vmatprep.subr.bf16.mxu0 0
      %385 = vmatpush1.bf16.msra.mxu0 %v330
      %386 = vmatprep.subr.bf16.mxu0 0
      %387 = vmatpush1.bf16.msra.mxu0 %v331
      %388 = vmatprep.mubr.bf16.mxu0 %v240
      %389 = vmatmul.mubr.bf16.gmra.mrb[0].mxu0 %v239
      %v390 = vpop.f32.mrb[0].mxu0
      %v391 = vadd.f32 0.0, %v390
      %v392 = vpop.f32.mrb[0].mxu0
      %v393 = vpop.f32.mrb[0].mxu0
      %v394 = vadd.f32 0.0, %v393
      %v395 = vpop.f32.mrb[0].mxu0
      %396 = vdwg.mxu0
      %397 = vmatprep.subr.bf16.mxu0 0
      %398 = vmatpush1.bf16.msra.mxu0 %v332
      %399 = vmatprep.subr.bf16.mxu0 0
      %400 = vmatpush1.bf16.msra.mxu0 %v333
      %401 = vmatprep.subr.bf16.mxu0 0
      %402 = vmatpush1.bf16.msra.mxu0 0
      %403 = vmatprep.subr.bf16.mxu0 0
      %404 = vmatpush1.bf16.msra.mxu0 0
      %405 = vmatprep.subr.bf16.mxu0 0
      %406 = vmatpush1.bf16.msra.mxu0 0
      %407 = vmatprep.subr.bf16.mxu0 0
      %408 = vmatpush1.bf16.msra.mxu0 0
      %409 = vmatprep.subr.bf16.mxu0 0
      %410 = vmatpush1.bf16.msra.mxu0 0
      %411 = vmatprep.subr.bf16.mxu0 0
      %412 = vmatpush1.bf16.msra.mxu0 0
      %413 = vmatprep.subr.bf16.mxu0 0
      %414 = vmatpush1.bf16.msra.mxu0 0
      %415 = vmatprep.subr.bf16.mxu0 0
      %416 = vmatpush1.bf16.msra.mxu0 0
      %417 = vmatprep.subr.bf16.mxu0 0
      %418 = vmatpush1.bf16.msra.mxu0 0
      %419 = vmatprep.subr.bf16.mxu0 0
      %420 = vmatpush1.bf16.msra.mxu0 0
      %421 = vmatprep.subr.bf16.mxu0 0
      %422 = vmatpush1.bf16.msra.mxu0 0
      %423 = vmatprep.subr.bf16.mxu0 0
      %424 = vmatpush1.bf16.msra.mxu0 0
      %425 = vmatprep.subr.bf16.mxu0 0
      %426 = vmatpush1.bf16.msra.mxu0 0
      %427 = vmatprep.subr.bf16.mxu0 0
      %428 = vmatpush1.bf16.msra.mxu0 0
      %429 = vmatprep.mubr.bf16.mxu0 0
      %430 = vmatmul.mubr.bf16.gmra.mrb[0].mxu0 %v354
      %v431 = vpop.f32.mrb[0].mxu0
      %v432 = vadd.f32 %v391, %v431
      %v433 = vpop.f32.mrb[0].mxu0
      %v434 = vpop.f32.mrb[0].mxu0
      %v435 = vadd.f32 %v394, %v434
      %v436 = vpop.f32.mrb[0].mxu0
      %437 = vdwg.mxu0
      %v438 = vadd.f32 %v432, %v435
      %v439 = vrot.slane %v438, 4
      %v440 = vadd.f32 %v438, %v439
      %v441 = vrot.slane %v440, 2
      %v442 = vadd.f32 %v440, %v441
      %v443 = vrot.slane %v442, 1
      %v444 = vadd.f32 %v442, %v443
      %v445 = vmul.f32 %v432, %v432
      %v446 = vmul.f32 %v435, %v435
      %v447 = vadd.f32 %v445, %v446
      %v448 = vrot.slane %v447, 4
      %v449 = vadd.f32 %v447, %v448
      %v450 = vrot.slane %v449, 2
      %v451 = vadd.f32 %v449, %v450
      %v452 = vrot.slane %v451, 1
      %v453 = vadd.f32 %v451, %v452
      %v454 = vpack.c.bf16 %v435, %v432
      %v456 = vunpack.c.l.b16 %v454
      %v457 = vunpack.c.h.b16 %v454
      %v458 = vpack.c.b16 %v456, %v456
      %v459 = vpack.c.b16 %v457, %v457
      %462 = vst [vmem:[%s182] sm:$0xf] %v458
      %463 = vst [vmem:[%s182 + $0x4] sm:$0xf] %v459
      %vm464 = vcmask 1040384
      %v465 = vsel %vm464, %v444, %v453
      %466 = vst [vmem:[%s187] sm:$0x3] %v465
      %s467 = smul.u32 2, %s15
      %p468 = scmp.lt.s32.totalorder %s467, 3
      %s469 = scalar_select %p468, %s467, 3
      %s470 = smul.addr %s469, 4
      %s471 = scalar_lea.vmem %s2, %s470
      %p472 = scmp.lt.s32.totalorder %s15, 1
      %s473 = scalar_select %p472, %s15, 1
      %s474 = smul.addr %s473, 2
      %s475 = scalar_lea.vmem %s3, %s474
      // Predicated region
      $region29: #{decoder_forward.5} parent=27 // pred_check
        %p476 = pneg %p80
      $region30: #{decoder_forward.5} parent=27 // pred_check_branch
        %478 = sbr.rel (%p476) target = $region32
      $region31: #{decoder_forward.5} parent=27 // pred_region
        %s479 = smul.u32 2, %s15
      $region32: #{decoder_forward.5} parent=27 // pred_fallthru
        _
      // Predicated region
      $region33: #{decoder_forward.5} parent=27 // pred_check
        %p480 = pneg %p106
      $region34: #{decoder_forward.5} parent=27 // pred_check_branch
        %482 = sbr.rel (%p480) target = $region36
      $region35: #{decoder_forward.5} parent=27 // pred_region
        _
      $region36: #{decoder_forward.5} parent=27 // pred_fallthru
        _
    $region28: #{decoder_forward.5} parent=5 // pred_fallthru
      _
    %p483 = scmp.le.s32.totalorder 2, %s10
    // Predicated region
    $region37: #{decoder_forward.5} parent=5 // pred_check
      %p484 = pneg %p483
    $region38: #{decoder_forward.5} parent=5 // pred_check_branch
      %486 = sbr.rel (%p484) target = $region40
    $region39: #{decoder_forward.5} parent=5 // pred_region
      %s487 = ssub.s32 %s10, 2
      // Predicated region
      $region41: #{decoder_forward.5} parent=39 // pred_check
        %p488 = pneg %p86
      $region42: #{decoder_forward.5} parent=39 // pred_check_branch
        %490 = sbr.rel (%p488) target = $region44
      $region43: #{decoder_forward.5} parent=39 // pred_region
        %s491 = smul.u32 2, %s16
        %p492 = scmp.lt.s32.totalorder %s491, 3
        %s493 = scalar_select %p492, %s491, 3
        %s494 = smul.addr %s493, 4
        %s495 = scalar_lea.vmem %s2, %s494
      $region44: #{decoder_forward.5} parent=39 // pred_fallthru
        _
      // Predicated region
      $region45: #{decoder_forward.5} parent=39 // pred_check
        %p496 = pneg %p112
      $region46: #{decoder_forward.5} parent=39 // pred_check_branch
        %498 = sbr.rel (%p496) target = $region48
      $region47: #{decoder_forward.5} parent=39 // pred_region
        %p499 = scmp.lt.s32.totalorder %s16, 1
        %s500 = scalar_select %p499, %s16, 1
        %s501 = smul.addr %s500, 2
        %s502 = scalar_lea.vmem %s3, %s501
      $region48: #{decoder_forward.5} parent=39 // pred_fallthru
        _
    $region40: #{decoder_forward.5} parent=5 // pred_fallthru
      _
  $region6: #{decoder_forward.5} parent=0 // loop_footer
    %s14 = sadd.s32 1, %s10
  $region7: #{decoder_forward.5} parent=0 // loop_footer_branch
    %9 = sbr.rel target = $region3
  $region8: #{decoder_forward.5} parent=0 // loop_exit
    _

// kernel: decoder_forward.7
$region0: #{decoder_forward.7}
  #allocation0 [shape = 'u32[]', space=smem, size = 0x4, offset = 0x4, fixed_abs, tag = 'smem constant byte address 0x4 - core index']
  #allocation1 [shape = 'u32[144,128]{1,0:T(1,128)}', space=vmem, size = 0x12000, scoped, tag = 'internal scratch']
  %s0 = inlined_call_operand.vmem [shape: bf16[128,144], index: 0, kind: input, shape index: {}]
  %s1 = inlined_call_operand.vmem [shape: bf16[144,128], index: 1, kind: input, shape index: {}]
  %s2 = inlined_call_operand.vmem [shape: f32[2,2,128], index: 2, kind: output, shape index: {}]
  %s3 = sld [smem:[#allocation0]]
  $region41: #{decoder_forward.7} parent=0
    _
  %s5 = ssub.s32 1, %s3
  %s6 = scalar_select 0, %s5, %s3
  loop: start=0, step=1, limit=4
  $region2: #{decoder_forward.7} parent=0 // loop_pre_header
    _
  $region3: #{decoder_forward.7} parent=0 // loop_header
    %s8 = sphi 0, %s12
    %p9 = scmp.ge.s32.totalorder %s8, 4
    %s18 = sphi 0, %s20
    %s21 = sphi 0, %s18
    %s22 = sphi 0, %s21
    %s38 = sphi 0, %s22
    %s42 = sphi 0, %s42
    %s44 = sphi 0, %s42
    %s45 = sphi 0, %s44
    %s59 = sphi 0, %s45
    %s65 = sphi 0, %s67
    %s68 = sphi 0, %s65
    %s69 = sphi 0, %s68
    %s85 = sphi 0, %s69
  $region4: #{decoder_forward.7} parent=0 // loop_header_branch
    %11 = sbr.rel (%p9) target = $region8
  $region5: #{decoder_forward.7} parent=0 // loop_body
    %s13 = ssub.s32 %s8, 1
    %s14 = ssub.s32 %s8, 2
    %s15 = sadd.s32 %s8, 1
    %s16 = ssub.s32 %s8, %s15
    %p17 = scmp.eq.s32.totalorder %s16, 0
    %s19 = sadd.s32 %s18, 1
    %s20 = scalar_select %p17, %s18, %s19
    %p23 = pneg %p17
    %p24 = scmp.eq.s32.totalorder %s8, 1
    %p25 = por %p23, %p24
    %p26 = scmp.ne.s32.totalorder %s18, %s21
    %p27 = scmp.eq.s32.totalorder %s8, 0
    %p28 = por %p26, %p27
    %p29 = scmp.ne.s32.totalorder %s18, %s21
    %p30 = scmp.eq.s32.totalorder %s13, 1
    %p31 = por %p29, %p30
    %p32 = scmp.ne.s32.totalorder %s21, %s22
    %p33 = scmp.eq.s32.totalorder %s13, 0
    %p34 = por %p32, %p33
    %p35 = scmp.ne.s32.totalorder %s21, %s22
    %p36 = scmp.eq.s32.totalorder %s14, 1
    %p37 = por %p35, %p36
    %p39 = scmp.ne.s32.totalorder %s22, %s38
    %p40 = scmp.eq.s32.totalorder %s14, 0
    %p41 = por %p39, %p40
    %s43 = sadd.s32 %s42, 1
    %p46 = scmp.eq.s32.totalorder %s8, 1
    %p47 = scmp.ne.s32.totalorder %s42, %s44
    %p48 = scmp.eq.s32.totalorder %s8, 0
    %p49 = por %p47, %p48
    %p50 = scmp.ne.s32.totalorder %s42, %s44
    %p51 = scmp.eq.s32.totalorder %s13, 1
    %p52 = por %p50, %p51
    %p53 = scmp.ne.s32.totalorder %s44, %s45
    %p54 = scmp.eq.s32.totalorder %s13, 0
    %p55 = por %p53, %p54
    %p56 = scmp.ne.s32.totalorder %s44, %s45
    %p57 = scmp.eq.s32.totalorder %s14, 1
    %p58 = por %p56, %p57
    %p60 = scmp.ne.s32.totalorder %s45, %s59
    %p61 = scmp.eq.s32.totalorder %s14, 0
    %p62 = por %p60, %p61
    %s63 = ssub.s32 %s8, %s15
    %p64 = scmp.eq.s32.totalorder %s63, 0
    %s66 = sadd.s32 %s65, 1
    %s67 = scalar_select %p64, %s65, %s66
    %p70 = pneg %p64
    %p71 = scmp.eq.s32.totalorder %s8, 1
    %p72 = por %p70, %p71
    %p73 = scmp.ne.s32.totalorder %s65, %s68
    %p74 = scmp.eq.s32.totalorder %s8, 0
    %p75 = por %p73, %p74
    %p76 = scmp.ne.s32.totalorder %s65, %s68
    %p77 = scmp.eq.s32.totalorder %s13, 1
    %p78 = por %p76, %p77
    %p79 = scmp.ne.s32.totalorder %s68, %s69
    %p80 = scmp.eq.s32.totalorder %s13, 0
    %p81 = por %p79, %p80
    %p82 = scmp.ne.s32.totalorder %s68, %s69
    %p83 = scmp.eq.s32.totalorder %s14, 1
    %p84 = por %p82, %p83
    %p86 = scmp.ne.s32.totalorder %s69, %s85
    %p87 = scmp.eq.s32.totalorder %s14, 0
    %p88 = por %p86, %p87
    %p89 = scmp.le.s32.totalorder 1, %s8
    %p90 = scmp.lt.s32.totalorder %s8, 3
    %p91 = pnand %p89, %p90
    %p92 = pneg %p91
    // Predicated region
    $region9: #{decoder_forward.7} parent=5 // pred_check
      _
    $region10: #{decoder_forward.7} parent=5 // pred_check_branch
      %94 = sbr.rel (%p91) target = $region12
    $region11: #{decoder_forward.7} parent=5 // pred_region
      %s95 = ssub.s32 %s8, 1
      // Predicated region
      $region13: #{decoder_forward.7} parent=11 // pred_check
        %p96 = pneg %p55
      $region14: #{decoder_forward.7} parent=11 // pred_check_branch
        %98 = sbr.rel (%p96) target = $region16
      $region15: #{decoder_forward.7} parent=11 // pred_region
        _
      $region16: #{decoder_forward.7} parent=11 // pred_fallthru
        _
    $region12: #{decoder_forward.7} parent=5 // pred_fallthru
      _
    %p99 = scmp.lt.s32.totalorder %s8, 2
    // Predicated region
    $region17: #{decoder_forward.7} parent=5 // pred_check
      %p100 = pneg %p99
    $region18: #{decoder_forward.7} parent=5 // pred_check_branch
      %102 = sbr.rel (%p100) target = $region20
    $region19: #{decoder_forward.7} parent=5 // pred_region
      // Predicated region
      $region21: #{decoder_forward.7} parent=19 // pred_check
        %p103 = pneg %p28
      $region22: #{decoder_forward.7} parent=19 // pred_check_branch
        %105 = sbr.rel (%p103) target = $region24
      $region23: #{decoder_forward.7} parent=19 // pred_region
        %s106 = smul.u32 8, %s8
        %p107 = scmp.lt.s32.totalorder %s106, 15
        %s108 = scalar_select %p107, %s106, 15
        %s109 = smul.addr %s108, 2
        %s110 = smul.addr %s109, 4
        %s111 = scalar_lea.vmem %s0, %s110
        %s112 = smul.u32 8, %s8
      $region24: #{decoder_forward.7} parent=19 // pred_fallthru
        _
    $region20: #{decoder_forward.7} parent=5 // pred_fallthru
      _
    %p113 = scmp.le.s32.totalorder 1, %s8
    %p114 = scmp.lt.s32.totalorder %s8, 3
    %p115 = pnand %p113, %p114
    %p116 = pneg %p115
    // Predicated region
    $region25: #{decoder_forward.7} parent=5 // pred_check
      _
    $region26: #{decoder_forward.7} parent=5 // pred_check_branch
      %118 = sbr.rel (%p115) target = $region28
    $region27: #{decoder_forward.7} parent=5 // pred_region
      %s119 = ssub.s32 %s8, 1
      %s120 = smul.u32 8, %s13
      %p121 = scmp.lt.s32.totalorder %s120, 15
      %s122 = scalar_select %p121, %s120, 15
      %s123 = smul.addr %s122, 2
      %s124 = smul.addr %s123, 4
      %s125 = scalar_lea.vmem %s0, %s124
      %p126 = pneg %p34
      %p127 = pneg %p31
      %p128 = pneg %p55
      %p129 = pneg %p52
      %p130 = pneg %p81
      %p131 = pneg %p78
      %p132 = scmp.lt.s32.totalorder %s13, 1
      %s133 = scalar_select %p132, %s13, 1
      %s134 = smul.addr %s133, 2
      %s135 = scalar_lea.vmem %s2, %s134
      %s136 = smul.u32 8, %s13
      %p137 = scmp.lt.s32.totalorder %s136, 15
      %s138 = scalar_select %p137, %s136, 15
      %s139 = smul.addr %s138, 2
      %s140 = smul.addr %s139, 4
      %s141 = scalar_lea.vmem %s0, %s140
      %s142 = smul.u32 8, %s13
      %p143 = scmp.lt.s32.totalorder %s13, 1
      %s144 = scalar_select %p143, %s13, 1
      %s145 = smul.addr %s144, 2
      %s146 = scalar_lea.vmem %s2, %s145
      %v148 = vld [vmem:[%s141] sm:$0xff]
      %v149 = vld [vmem:[%s141 + $0x8] sm:$0xff]
      %v150 = vld [vmem:[%s141 + $0x10] sm:$0xff]
      %v151 = vld [vmem:[%s141 + $0x18] sm:$0xff]
      %v152 = vld [vmem:[%s141 + $0x20] sm:$0xff]
      %v153 = vld [vmem:[%s141 + $0x28] sm:$0xff]
      %v154 = vld [vmem:[%s141 + $0x30] sm:$0xff]
      %v155 = vld [vmem:[%s141 + $0x38] sm:$0xff]
      %v156 = vld [vmem:[%s1] sm:$0xf]
      %v157 = vld [vmem:[%s1 + $0x4] sm:$0xf]
      %v158 = vld [vmem:[%s1 + $0x8] sm:$0xf]
      %v159 = vld [vmem:[%s1 + $0xc] sm:$0xf]
      %v160 = vld [vmem:[%s1 + $0x10] sm:$0xf]
      %v161 = vld [vmem:[%s1 + $0x14] sm:$0xf]
      %v162 = vld [vmem:[%s1 + $0x18] sm:$0xf]
      %v163 = vld [vmem:[%s1 + $0x1c] sm:$0xf]
      %v164 = vld [vmem:[%s1 + $0x20] sm:$0xf]
      %v165 = vld [vmem:[%s1 + $0x24] sm:$0xf]
      %v166 = vld [vmem:[%s1 + $0x28] sm:$0xf]
      %v167 = vld [vmem:[%s1 + $0x2c] sm:$0xf]
      %v168 = vld [vmem:[%s1 + $0x30] sm:$0xf]
      %v169 = vld [vmem:[%s1 + $0x34] sm:$0xf]
      %v170 = vld [vmem:[%s1 + $0x38] sm:$0xf]
      %v171 = vld [vmem:[%s1 + $0x3c] sm:$0xf]
      %v172 = vld [vmem:[%s1 + $0x40] sm:$0xf]
      %v173 = vld [vmem:[%s1 + $0x44] sm:$0xf]
      %v182 = vunpack.c.l.b16 %v148
      %v183 = vunpack.c.h.b16 %v148
      %v184 = vunpack.c.l.b16 %v149
      %v185 = vunpack.c.h.b16 %v149
      %v186 = vunpack.c.l.b16 %v150
      %v187 = vunpack.c.h.b16 %v150
      %v188 = vunpack.c.l.b16 %v151
      %v189 = vunpack.c.h.b16 %v151
      %v190 = vunpack.c.l.b16 %v152
      %v191 = vunpack.c.h.b16 %v152
      %v192 = vunpack.c.l.b16 %v153
      %v193 = vunpack.c.h.b16 %v153
      %v194 = vunpack.c.l.b16 %v154
      %v195 = vunpack.c.h.b16 %v154
      %v196 = vunpack.c.l.b16 %v155
      %v197 = vunpack.c.h.b16 %v155
      %v198 = vpack.c.b16 %v184, %v182
      %v199 = vpack.c.b16 %v185, %v183
      %v200 = vpack.c.b16 %v188, %v186
      %v201 = vpack.c.b16 %v189, %v187
      %v202 = vpack.c.b16 %v192, %v190
      %v203 = vpack.c.b16 %v193, %v191
      %v204 = vpack.c.b16 %v196, %v194
      %v205 = vpack.c.b16 %v197, %v195
      %v228 = vunpack.c.l.b16 %v156
      %v229 = vunpack.c.l.b16 %v157
      %v230 = vunpack.c.l.b16 %v158
      %v231 = vunpack.c.l.b16 %v159
      %v232 = vunpack.c.l.b16 %v160
      %v233 = vunpack.c.l.b16 %v161
      %v234 = vunpack.c.l.b16 %v162
      %v235 = vunpack.c.l.b16 %v163
      %v236 = vunpack.c.l.b16 %v164
      %v237 = vunpack.c.l.b16 %v165
      %v238 = vunpack.c.l.b16 %v166
      %v239 = vunpack.c.l.b16 %v167
      %v240 = vunpack.c.l.b16 %v168
      %v241 = vunpack.c.l.b16 %v169
      %v242 = vunpack.c.l.b16 %v170
      %v243 = vunpack.c.l.b16 %v171
      %v244 = vunpack.c.l.b16 %v172
      %v245 = vunpack.c.l.b16 %v173
      %v246 = vpack.c.b16 %v229, %v228
      %v247 = vpack.c.b16 %v231, %v230
      %v248 = vpack.c.b16 %v233, %v232
      %v249 = vpack.c.b16 %v235, %v234
      %v250 = vpack.c.b16 %v237, %v236
      %v251 = vpack.c.b16 %v239, %v238
      %v252 = vpack.c.b16 %v241, %v240
      %v253 = vpack.c.b16 %v243, %v242
      %v254 = vpack.c.b16 %v245, %v244
      %vm264 = vcmask 130048
      %v266 = vsel %vm264, %v199, 0
      %v269 = vsel %vm264, %v201, 0
      %v272 = vsel %vm264, %v203, 0
      %v275 = vsel %vm264, %v205, 0
      %277 = vmatprep.subr.bf16.mxu0 0
      %278 = vmatpush1.bf16.msra.mxu0 %v246
      %279 = vmatprep.subr.bf16.mxu0 0
      %280 = vmatpush1.bf16.msra.mxu0 %v247
      %281 = vmatprep.subr.bf16.mxu0 0
      %282 = vmatpush1.bf16.msra.mxu0 %v248
      %283 = vmatprep.subr.bf16.mxu0 0
      %284 = vmatpush1.bf16.msra.mxu0 %v249
      %285 = vmatprep.subr.bf16.mxu0 0
      %286 = vmatpush1.bf16.msra.mxu0 %v250
      %287 = vmatprep.subr.bf16.mxu0 0
      %288 = vmatpush1.bf16.msra.mxu0 %v251
      %289 = vmatprep.subr.bf16.mxu0 0
      %290 = vmatpush1.bf16.msra.mxu0 %v252
      %291 = vmatprep.subr.bf16.mxu0 0
      %292 = vmatpush1.bf16.msra.mxu0 %v253
      %293 = vmatprep.subr.bf16.mxu0 0
      %294 = vmatpush1.bf16.msra.mxu0 %v254
      %295 = vmatprep.subr.bf16.mxu0 0
      %296 = vmatpush1.bf16.msra.mxu0 0
      %297 = vmatprep.subr.bf16.mxu0 0
      %298 = vmatpush1.bf16.msra.mxu0 0
      %299 = vmatprep.subr.bf16.mxu0 0
      %300 = vmatpush1.bf16.msra.mxu0 0
      %301 = vmatprep.subr.bf16.mxu0 0
      %302 = vmatpush1.bf16.msra.mxu0 0
      %303 = vmatprep.subr.bf16.mxu0 0
      %304 = vmatpush1.bf16.msra.mxu0 0
      %305 = vmatprep.subr.bf16.mxu0 0
      %306 = vmatpush1.bf16.msra.mxu0 0
      %307 = vmatprep.subr.bf16.mxu0 0
      %308 = vmatpush1.bf16.msra.mxu0 0
      %309 = vmatprep.mubr.bf16.mxu0 %v266
      %310 = vmatmul.mubr.bf16.gmra.mrb[0].mxu0 %v198
      %v311 = vpop.f32.mrb[0].mxu0
      %v312 = vadd.f32 0.0, %v311
      %v313 = vpop.f32.mrb[0].mxu0
      %v314 = vpop.f32.mrb[0].mxu0
      %v315 = vadd.f32 0.0, %v314
      %v316 = vpop.f32.mrb[0].mxu0
      %317 = vmatprep.mubr.bf16.mxu0 %v269
      %318 = vmatmul.mubr.bf16.gmra.mrb[0].mxu0 %v200
      %v319 = vpop.f32.mrb[0].mxu0
      %v320 = vadd.f32 0.0, %v319
      %v321 = vpop.f32.mrb[0].mxu0
      %v322 = vpop.f32.mrb[0].mxu0
      %v323 = vadd.f32 0.0, %v322
      %v324 = vpop.f32.mrb[0].mxu0
      %325 = vmatprep.mubr.bf16.mxu0 %v272
      %326 = vmatmul.mubr.bf16.gmra.mrb[0].mxu0 %v202
      %v327 = vpop.f32.mrb[0].mxu0
      %v328 = vadd.f32 0.0, %v327
      %v329 = vpop.f32.mrb[0].mxu0
      %v330 = vpop.f32.mrb[0].mxu0
      %v331 = vadd.f32 0.0, %v330
      %v332 = vpop.f32.mrb[0].mxu0
      %333 = vmatprep.mubr.bf16.mxu0 %v275
      %334 = vmatmul.mubr.bf16.gmra.mrb[0].mxu0 %v204
      %v335 = vpop.f32.mrb[0].mxu0
      %v336 = vadd.f32 0.0, %v335
      %v337 = vpop.f32.mrb[0].mxu0
      %v338 = vpop.f32.mrb[0].mxu0
      %v339 = vadd.f32 0.0, %v338
      %v340 = vpop.f32.mrb[0].mxu0
      %341 = vdwg.mxu0
      %v342 = vadd.f32 %v312, %v315
      %v343 = vadd.f32 %v342, %v320
      %v344 = vadd.f32 %v343, %v323
      %v345 = vadd.f32 %v344, %v328
      %v346 = vadd.f32 %v345, %v331
      %v347 = vadd.f32 %v346, %v336
      %v348 = vadd.f32 %v347, %v339
      %v349 = vrot.slane %v348, 4
      %v350 = vadd.f32 %v348, %v349
      %v351 = vrot.slane %v350, 2
      %v352 = vadd.f32 %v350, %v351
      %v353 = vrot.slane %v352, 1
      %v354 = vadd.f32 %v352, %v353
      %v355 = vmul.f32 %v312, %v312
      %v356 = vmul.f32 %v315, %v315
      %v357 = vmul.f32 %v320, %v320
      %v358 = vmul.f32 %v323, %v323
      %v359 = vmul.f32 %v328, %v328
      %v360 = vmul.f32 %v331, %v331
      %v361 = vmul.f32 %v336, %v336
      %v362 = vmul.f32 %v339, %v339
      %v363 = vadd.f32 %v355, %v356
      %v364 = vadd.f32 %v363, %v357
      %v365 = vadd.f32 %v364, %v358
      %v366 = vadd.f32 %v365, %v359
      %v367 = vadd.f32 %v366, %v360
      %v368 = vadd.f32 %v367, %v361
      %v369 = vadd.f32 %v368, %v362
      %v370 = vrot.slane %v369, 4
      %v371 = vadd.f32 %v369, %v370
      %v372 = vrot.slane %v371, 2
      %v373 = vadd.f32 %v371, %v372
      %v374 = vrot.slane %v373, 1
      %v375 = vadd.f32 %v373, %v374
      %vm376 = vcmask 1040384
      %v377 = vsel %vm376, %v354, %v375
      %378 = vst [vmem:[%s146] sm:$0x3] %v377
      %p379 = scmp.lt.s32.totalorder %s13, 1
      %s380 = scalar_select %p379, %s13, 1
      %s381 = smul.addr %s380, 2
      %s382 = scalar_lea.vmem %s2, %s381
      // Predicated region
      $region29: #{decoder_forward.7} parent=27 // pred_check
        %p383 = pneg %p78
      $region30: #{decoder_forward.7} parent=27 // pred_check_branch
        %385 = sbr.rel (%p383) target = $region32
      $region31: #{decoder_forward.7} parent=27 // pred_region
        _
      $region32: #{decoder_forward.7} parent=27 // pred_fallthru
        _
    $region28: #{decoder_forward.7} parent=5 // pred_fallthru
      _
    %p386 = scmp.le.s32.totalorder 2, %s8
    // Predicated region
    $region33: #{decoder_forward.7} parent=5 // pred_check
      %p387 = pneg %p386
    $region34: #{decoder_forward.7} parent=5 // pred_check_branch
      %389 = sbr.rel (%p387) target = $region36
    $region35: #{decoder_forward.7} parent=5 // pred_region
      %s390 = ssub.s32 %s8, 2
      // Predicated region
      $region37: #{decoder_forward.7} parent=35 // pred_check
        %p391 = pneg %p84
      $region38: #{decoder_forward.7} parent=35 // pred_check_branch
        %393 = sbr.rel (%p391) target = $region40
      $region39: #{decoder_forward.7} parent=35 // pred_region
        %p394 = scmp.lt.s32.totalorder %s14, 1
        %s395 = scalar_select %p394, %s14, 1
        %s396 = smul.addr %s395, 2
        %s397 = scalar_lea.vmem %s2, %s396
      $region40: #{decoder_forward.7} parent=35 // pred_fallthru
        _
    $region36: #{decoder_forward.7} parent=5 // pred_fallthru
      _
  $region6: #{decoder_forward.7} parent=0 // loop_footer
    %s12 = sadd.s32 1, %s8
  $region7: #{decoder_forward.7} parent=0 // loop_footer_branch
    %7 = sbr.rel target = $region3
  $region8: #{decoder_forward.7} parent=0 // loop_exit
    _

// kernel: decoder_forward.8
$region0: #{decoder_forward.8}
  #allocation0 [shape = 'u32[]', space=smem, size = 0x4, offset = 0x4, fixed_abs, tag = 'smem constant byte address 0x4 - core index']
  #allocation1 [shape = 'u32[144,128]{1,0:T(1,128)}', space=vmem, size = 0x12000, scoped, tag = 'internal scratch']
  %s0 = inlined_call_operand.vmem [shape: bf16[128,144], index: 0, kind: input, shape index: {}]
  %s1 = inlined_call_operand.vmem [shape: bf16[144,128], index: 1, kind: input, shape index: {}]
  %s2 = inlined_call_operand.vmem [shape: f32[1,128], index: 2, kind: input, shape index: {}]
  %s3 = inlined_call_operand.vmem [shape: f32[1,128], index: 3, kind: input, shape index: {}]
  %s4 = inlined_call_operand.vmem [shape: bf16[128,128], index: 4, kind: output, shape index: {}]
  %s5 = sld [smem:[#allocation0]]
  $region49: #{decoder_forward.8} parent=0
    _
  %s7 = ssub.s32 1, %s5
  %s8 = scalar_select 0, %s7, %s5
  loop: start=0, step=1, limit=4
  $region2: #{decoder_forward.8} parent=0 // loop_pre_header
    _
  $region3: #{decoder_forward.8} parent=0 // loop_header
    %s10 = sphi 0, %s14
    %p11 = scmp.ge.s32.totalorder %s10, 4
    %s20 = sphi 0, %s22
    %s23 = sphi 0, %s20
    %s24 = sphi 0, %s23
    %s40 = sphi 0, %s24
    %s44 = sphi 0, %s44
    %s46 = sphi 0, %s44
    %s47 = sphi 0, %s46
    %s61 = sphi 0, %s47
    %s65 = sphi 0, %s65
    %s67 = sphi 0, %s65
    %s68 = sphi 0, %s67
    %s82 = sphi 0, %s68
    %s86 = sphi 0, %s86
    %s88 = sphi 0, %s86
    %s89 = sphi 0, %s88
    %s103 = sphi 0, %s89
    %s109 = sphi 0, %s111
    %s112 = sphi 0, %s109
    %s113 = sphi 0, %s112
    %s129 = sphi 0, %s113
  $region4: #{decoder_forward.8} parent=0 // loop_header_branch
    %13 = sbr.rel (%p11) target = $region8
  $region5: #{decoder_forward.8} parent=0 // loop_body
    %s15 = ssub.s32 %s10, 1
    %s16 = ssub.s32 %s10, 2
    %s17 = sadd.s32 %s10, 1
    %s18 = ssub.s32 %s10, %s17
    %p19 = scmp.eq.s32.totalorder %s18, 0
    %s21 = sadd.s32 %s20, 1
    %s22 = scalar_select %p19, %s20, %s21
    %p25 = pneg %p19
    %p26 = scmp.eq.s32.totalorder %s10, 1
    %p27 = por %p25, %p26
    %p28 = scmp.ne.s32.totalorder %s20, %s23
    %p29 = scmp.eq.s32.totalorder %s10, 0
    %p30 = por %p28, %p29
    %p31 = scmp.ne.s32.totalorder %s20, %s23
    %p32 = scmp.eq.s32.totalorder %s15, 1
    %p33 = por %p31, %p32
    %p34 = scmp.ne.s32.totalorder %s23, %s24
    %p35 = scmp.eq.s32.totalorder %s15, 0
    %p36 = por %p34, %p35
    %p37 = scmp.ne.s32.totalorder %s23, %s24
    %p38 = scmp.eq.s32.totalorder %s16, 1
    %p39 = por %p37, %p38
    %p41 = scmp.ne.s32.totalorder %s24, %s40
    %p42 = scmp.eq.s32.totalorder %s16, 0
    %p43 = por %p41, %p42
    %s45 = sadd.s32 %s44, 1
    %p48 = scmp.eq.s32.totalorder %s10, 1
    %p49 = scmp.ne.s32.totalorder %s44, %s46
    %p50 = scmp.eq.s32.totalorder %s10, 0
    %p51 = por %p49, %p50
    %p52 = scmp.ne.s32.totalorder %s44, %s46
    %p53 = scmp.eq.s32.totalorder %s15, 1
    %p54 = por %p52, %p53
    %p55 = scmp.ne.s32.totalorder %s46, %s47
    %p56 = scmp.eq.s32.totalorder %s15, 0
    %p57 = por %p55, %p56
    %p58 = scmp.ne.s32.totalorder %s46, %s47
    %p59 = scmp.eq.s32.totalorder %s16, 1
    %p60 = por %p58, %p59
    %p62 = scmp.ne.s32.totalorder %s47, %s61
    %p63 = scmp.eq.s32.totalorder %s16, 0
    %p64 = por %p62, %p63
    %s66 = sadd.s32 %s65, 1
    %p69 = scmp.eq.s32.totalorder %s10, 1
    %p70 = scmp.ne.s32.totalorder %s65, %s67
    %p71 = scmp.eq.s32.totalorder %s10, 0
    %p72 = por %p70, %p71
    %p73 = scmp.ne.s32.totalorder %s65, %s67
    %p74 = scmp.eq.s32.totalorder %s15, 1
    %p75 = por %p73, %p74
    %p76 = scmp.ne.s32.totalorder %s67, %s68
    %p77 = scmp.eq.s32.totalorder %s15, 0
    %p78 = por %p76, %p77
    %p79 = scmp.ne.s32.totalorder %s67, %s68
    %p80 = scmp.eq.s32.totalorder %s16, 1
    %p81 = por %p79, %p80
    %p83 = scmp.ne.s32.totalorder %s68, %s82
    %p84 = scmp.eq.s32.totalorder %s16, 0
    %p85 = por %p83, %p84
    %s87 = sadd.s32 %s86, 1
    %p90 = scmp.eq.s32.totalorder %s10, 1
    %p91 = scmp.ne.s32.totalorder %s86, %s88
    %p92 = scmp.eq.s32.totalorder %s10, 0
    %p93 = por %p91, %p92
    %p94 = scmp.ne.s32.totalorder %s86, %s88
    %p95 = scmp.eq.s32.totalorder %s15, 1
    %p96 = por %p94, %p95
    %p97 = scmp.ne.s32.totalorder %s88, %s89
    %p98 = scmp.eq.s32.totalorder %s15, 0
    %p99 = por %p97, %p98
    %p100 = scmp.ne.s32.totalorder %s88, %s89
    %p101 = scmp.eq.s32.totalorder %s16, 1
    %p102 = por %p100, %p101
    %p104 = scmp.ne.s32.totalorder %s89, %s103
    %p105 = scmp.eq.s32.totalorder %s16, 0
    %p106 = por %p104, %p105
    %s107 = ssub.s32 %s10, %s17
    %p108 = scmp.eq.s32.totalorder %s107, 0
    %s110 = sadd.s32 %s109, 1
    %s111 = scalar_select %p108, %s109, %s110
    %p114 = pneg %p108
    %p115 = scmp.eq.s32.totalorder %s10, 1
    %p116 = por %p114, %p115
    %p117 = scmp.ne.s32.totalorder %s109, %s112
    %p118 = scmp.eq.s32.totalorder %s10, 0
    %p119 = por %p117, %p118
    %p120 = scmp.ne.s32.totalorder %s109, %s112
    %p121 = scmp.eq.s32.totalorder %s15, 1
    %p122 = por %p120, %p121
    %p123 = scmp.ne.s32.totalorder %s112, %s113
    %p124 = scmp.eq.s32.totalorder %s15, 0
    %p125 = por %p123, %p124
    %p126 = scmp.ne.s32.totalorder %s112, %s113
    %p127 = scmp.eq.s32.totalorder %s16, 1
    %p128 = por %p126, %p127
    %p130 = scmp.ne.s32.totalorder %s113, %s129
    %p131 = scmp.eq.s32.totalorder %s16, 0
    %p132 = por %p130, %p131
    %p133 = scmp.le.s32.totalorder 1, %s10
    %p134 = scmp.lt.s32.totalorder %s10, 3
    %p135 = pnand %p133, %p134
    %p136 = pneg %p135
    // Predicated region
    $region9: #{decoder_forward.8} parent=5 // pred_check
      _
    $region10: #{decoder_forward.8} parent=5 // pred_check_branch
      %138 = sbr.rel (%p135) target = $region12
    $region11: #{decoder_forward.8} parent=5 // pred_region
      %s139 = ssub.s32 %s10, 1
      // Predicated region
      $region13: #{decoder_forward.8} parent=11 // pred_check
        %p140 = pneg %p57
      $region14: #{decoder_forward.8} parent=11 // pred_check_branch
        %142 = sbr.rel (%p140) target = $region16
      $region15: #{decoder_forward.8} parent=11 // pred_region
        _
      $region16: #{decoder_forward.8} parent=11 // pred_fallthru
        _
      // Predicated region
      $region17: #{decoder_forward.8} parent=11 // pred_check
        %p143 = pneg %p78
      $region18: #{decoder_forward.8} parent=11 // pred_check_branch
        %145 = sbr.rel (%p143) target = $region20
      $region19: #{decoder_forward.8} parent=11 // pred_region
        _
      $region20: #{decoder_forward.8} parent=11 // pred_fallthru
        _
      // Predicated region
      $region21: #{decoder_forward.8} parent=11 // pred_check
        %p146 = pneg %p99
      $region22: #{decoder_forward.8} parent=11 // pred_check_branch
        %148 = sbr.rel (%p146) target = $region24
      $region23: #{decoder_forward.8} parent=11 // pred_region
        _
      $region24: #{decoder_forward.8} parent=11 // pred_fallthru
        _
    $region12: #{decoder_forward.8} parent=5 // pred_fallthru
      _
    %p149 = scmp.lt.s32.totalorder %s10, 2
    // Predicated region
    $region25: #{decoder_forward.8} parent=5 // pred_check
      %p150 = pneg %p149
    $region26: #{decoder_forward.8} parent=5 // pred_check_branch
      %152 = sbr.rel (%p150) target = $region28
    $region27: #{decoder_forward.8} parent=5 // pred_region
      // Predicated region
      $region29: #{decoder_forward.8} parent=27 // pred_check
        %p153 = pneg %p30
      $region30: #{decoder_forward.8} parent=27 // pred_check_branch
        %155 = sbr.rel (%p153) target = $region32
      $region31: #{decoder_forward.8} parent=27 // pred_region
        %s156 = smul.u32 8, %s10
        %p157 = scmp.lt.s32.totalorder %s156, 15
        %s158 = scalar_select %p157, %s156, 15
        %s159 = smul.addr %s158, 2
        %s160 = smul.addr %s159, 4
        %s161 = scalar_lea.vmem %s0, %s160
        %s162 = smul.u32 8, %s10
      $region32: #{decoder_forward.8} parent=27 // pred_fallthru
        _
    $region28: #{decoder_forward.8} parent=5 // pred_fallthru
      _
    %p163 = scmp.le.s32.totalorder 1, %s10
    %p164 = scmp.lt.s32.totalorder %s10, 3
    %p165 = pnand %p163, %p164
    %p166 = pneg %p165
    // Predicated region
    $region33: #{decoder_forward.8} parent=5 // pred_check
      _
    $region34: #{decoder_forward.8} parent=5 // pred_check_branch
      %168 = sbr.rel (%p165) target = $region36
    $region35: #{decoder_forward.8} parent=5 // pred_region
      %s169 = ssub.s32 %s10, 1
      %s170 = smul.u32 8, %s15
      %p171 = scmp.lt.s32.totalorder %s170, 15
      %s172 = scalar_select %p171, %s170, 15
      %s173 = smul.addr %s172, 2
      %s174 = smul.addr %s173, 4
      %s175 = scalar_lea.vmem %s0, %s174
      %p176 = pneg %p36
      %p177 = pneg %p33
      %p178 = pneg %p57
      %p179 = pneg %p54
      %p180 = pneg %p78
      %p181 = pneg %p75
      %p182 = pneg %p99
      %p183 = pneg %p96
      %p184 = pneg %p125
      %p185 = pneg %p122
      %s186 = smul.u32 8, %s15
      %p187 = scmp.lt.s32.totalorder %s186, 15
      %s188 = scalar_select %p187, %s186, 15
      %s189 = smul.addr %s188, 4
      %s190 = scalar_lea.vmem %s4, %s189
      %s191 = smul.u32 8, %s15
      %p192 = scmp.lt.s32.totalorder %s191, 15
      %s193 = scalar_select %p192, %s191, 15
      %s194 = smul.addr %s193, 2
      %s195 = smul.addr %s194, 4
      %s196 = scalar_lea.vmem %s0, %s195
      %s197 = smul.u32 8, %s15
      %s198 = smul.u32 8, %s15
      %p199 = scmp.lt.s32.totalorder %s198, 15
      %s200 = scalar_select %p199, %s198, 15
      %s201 = smul.addr %s200, 4
      %s202 = scalar_lea.vmem %s4, %s201
      %s203 = smul.u32 8, %s15
      %v205 = vld [vmem:[%s196] sm:$0xff]
      %v206 = vld [vmem:[%s196 + $0x8] sm:$0xff]
      %v207 = vld [vmem:[%s196 + $0x10] sm:$0xff]
      %v208 = vld [vmem:[%s196 + $0x18] sm:$0xff]
      %v209 = vld [vmem:[%s196 + $0x20] sm:$0xff]
      %v210 = vld [vmem:[%s196 + $0x28] sm:$0xff]
      %v211 = vld [vmem:[%s196 + $0x30] sm:$0xff]
      %v212 = vld [vmem:[%s196 + $0x38] sm:$0xff]
      %v213 = vld [vmem:[%s1] sm:$0xf]
      %v214 = vld [vmem:[%s1 + $0x4] sm:$0xf]
      %v215 = vld [vmem:[%s1 + $0x8] sm:$0xf]
      %v216 = vld [vmem:[%s1 + $0xc] sm:$0xf]
      %v217 = vld [vmem:[%s1 + $0x10] sm:$0xf]
      %v218 = vld [vmem:[%s1 + $0x14] sm:$0xf]
      %v219 = vld [vmem:[%s1 + $0x18] sm:$0xf]
      %v220 = vld [vmem:[%s1 + $0x1c] sm:$0xf]
      %v221 = vld [vmem:[%s1 + $0x20] sm:$0xf]
      %v222 = vld [vmem:[%s1 + $0x24] sm:$0xf]
      %v223 = vld [vmem:[%s1 + $0x28] sm:$0xf]
      %v224 = vld [vmem:[%s1 + $0x2c] sm:$0xf]
      %v225 = vld [vmem:[%s1 + $0x30] sm:$0xf]
      %v226 = vld [vmem:[%s1 + $0x34] sm:$0xf]
      %v227 = vld [vmem:[%s1 + $0x38] sm:$0xf]
      %v228 = vld [vmem:[%s1 + $0x3c] sm:$0xf]
      %v229 = vld [vmem:[%s1 + $0x40] sm:$0xf]
      %v230 = vld [vmem:[%s1 + $0x44] sm:$0xf]
      %v239 = vunpack.c.l.b16 %v205
      %v240 = vunpack.c.h.b16 %v205
      %v241 = vunpack.c.l.b16 %v206
      %v242 = vunpack.c.h.b16 %v206
      %v243 = vunpack.c.l.b16 %v207
      %v244 = vunpack.c.h.b16 %v207
      %v245 = vunpack.c.l.b16 %v208
      %v246 = vunpack.c.h.b16 %v208
      %v247 = vunpack.c.l.b16 %v209
      %v248 = vunpack.c.h.b16 %v209
      %v249 = vunpack.c.l.b16 %v210
      %v250 = vunpack.c.h.b16 %v210
      %v251 = vunpack.c.l.b16 %v211
      %v252 = vunpack.c.h.b16 %v211
      %v253 = vunpack.c.l.b16 %v212
      %v254 = vunpack.c.h.b16 %v212
      %v255 = vpack.c.b16 %v241, %v239
      %v256 = vpack.c.b16 %v242, %v240
      %v257 = vpack.c.b16 %v245, %v243
      %v258 = vpack.c.b16 %v246, %v244
      %v259 = vpack.c.b16 %v249, %v247
      %v260 = vpack.c.b16 %v250, %v248
      %v261 = vpack.c.b16 %v253, %v251
      %v262 = vpack.c.b16 %v254, %v252
      %v285 = vunpack.c.l.b16 %v213
      %v286 = vunpack.c.l.b16 %v214
      %v287 = vunpack.c.l.b16 %v215
      %v288 = vunpack.c.l.b16 %v216
      %v289 = vunpack.c.l.b16 %v217
      %v290 = vunpack.c.l.b16 %v218
      %v291 = vunpack.c.l.b16 %v219
      %v292 = vunpack.c.l.b16 %v220
      %v293 = vunpack.c.l.b16 %v221
      %v294 = vunpack.c.l.b16 %v222
      %v295 = vunpack.c.l.b16 %v223
      %v296 = vunpack.c.l.b16 %v224
      %v297 = vunpack.c.l.b16 %v225
      %v298 = vunpack.c.l.b16 %v226
      %v299 = vunpack.c.l.b16 %v227
      %v300 = vunpack.c.l.b16 %v228
      %v301 = vunpack.c.l.b16 %v229
      %v302 = vunpack.c.l.b16 %v230
      %v303 = vpack.c.b16 %v286, %v285
      %v304 = vpack.c.b16 %v288, %v287
      %v305 = vpack.c.b16 %v290, %v289
      %v306 = vpack.c.b16 %v292, %v291
      %v307 = vpack.c.b16 %v294, %v293
      %v308 = vpack.c.b16 %v296, %v295
      %v309 = vpack.c.b16 %v298, %v297
      %v310 = vpack.c.b16 %v300, %v299
      %v311 = vpack.c.b16 %v302, %v301
      %vm321 = vcmask 130048
      %v323 = vsel %vm321, %v256, 0
      %v326 = vsel %vm321, %v258, 0
      %v329 = vsel %vm321, %v260, 0
      %v332 = vsel %vm321, %v262, 0
      %334 = vmatprep.subr.bf16.mxu0 0
      %335 = vmatpush1.bf16.msra.mxu0 %v303
      %336 = vmatprep.subr.bf16.mxu0 0
      %337 = vmatpush1.bf16.msra.mxu0 %v304
      %338 = vmatprep.subr.bf16.mxu0 0
      %339 = vmatpush1.bf16.msra.mxu0 %v305
      %340 = vmatprep.subr.bf16.mxu0 0
      %341 = vmatpush1.bf16.msra.mxu0 %v306
      %342 = vmatprep.subr.bf16.mxu0 0
      %343 = vmatpush1.bf16.msra.mxu0 %v307
      %344 = vmatprep.subr.bf16.mxu0 0
      %345 = vmatpush1.bf16.msra.mxu0 %v308
      %346 = vmatprep.subr.bf16.mxu0 0
      %347 = vmatpush1.bf16.msra.mxu0 %v309
      %348 = vmatprep.subr.bf16.mxu0 0
      %349 = vmatpush1.bf16.msra.mxu0 %v310
      %350 = vmatprep.subr.bf16.mxu0 0
      %351 = vmatpush1.bf16.msra.mxu0 %v311
      %352 = vmatprep.subr.bf16.mxu0 0
      %353 = vmatpush1.bf16.msra.mxu0 0
      %354 = vmatprep.subr.bf16.mxu0 0
      %355 = vmatpush1.bf16.msra.mxu0 0
      %356 = vmatprep.subr.bf16.mxu0 0
      %357 = vmatpush1.bf16.msra.mxu0 0
      %358 = vmatprep.subr.bf16.mxu0 0
      %359 = vmatpush1.bf16.msra.mxu0 0
      %360 = vmatprep.subr.bf16.mxu0 0
      %361 = vmatpush1.bf16.msra.mxu0 0
      %362 = vmatprep.subr.bf16.mxu0 0
      %363 = vmatpush1.bf16.msra.mxu0 0
      %364 = vmatprep.subr.bf16.mxu0 0
      %365 = vmatpush1.bf16.msra.mxu0 0
      %366 = vmatprep.mubr.bf16.mxu0 %v323
      %367 = vmatmul.mubr.bf16.gmra.mrb[0].mxu0 %v255
      %v368 = vpop.f32.mrb[0].mxu0
      %v369 = vadd.f32 0.0, %v368
      %v370 = vpop.f32.mrb[0].mxu0
      %v371 = vpop.f32.mrb[0].mxu0
      %v372 = vadd.f32 0.0, %v371
      %v373 = vpop.f32.mrb[0].mxu0
      %374 = vmatprep.mubr.bf16.mxu0 %v326
      %375 = vmatmul.mubr.bf16.gmra.mrb[0].mxu0 %v257
      %v376 = vpop.f32.mrb[0].mxu0
      %v377 = vadd.f32 0.0, %v376
      %v378 = vpop.f32.mrb[0].mxu0
      %v379 = vpop.f32.mrb[0].mxu0
      %v380 = vadd.f32 0.0, %v379
      %v381 = vpop.f32.mrb[0].mxu0
      %382 = vmatprep.mubr.bf16.mxu0 %v329
      %383 = vmatmul.mubr.bf16.gmra.mrb[0].mxu0 %v259
      %v384 = vpop.f32.mrb[0].mxu0
      %v385 = vadd.f32 0.0, %v384
      %v386 = vpop.f32.mrb[0].mxu0
      %v387 = vpop.f32.mrb[0].mxu0
      %v388 = vadd.f32 0.0, %v387
      %v389 = vpop.f32.mrb[0].mxu0
      %390 = vmatprep.mubr.bf16.mxu0 %v332
      %391 = vmatmul.mubr.bf16.gmra.mrb[0].mxu0 %v261
      %v392 = vpop.f32.mrb[0].mxu0
      %v393 = vadd.f32 0.0, %v392
      %v394 = vpop.f32.mrb[0].mxu0
      %v395 = vpop.f32.mrb[0].mxu0
      %v396 = vadd.f32 0.0, %v395
      %v397 = vpop.f32.mrb[0].mxu0
      %398 = vdwg.mxu0
      %v399 = vld [vmem:[%s2] sm:$0x1]
      %v401 = vlaneseq
      %v402 = vshrl.u32 %v401, 7
      %v403 = vsub.s32 0, %v402
      %v404 = vrot.slane %v399, %v403
      %v406 = vmul.f32 %v369, %v404
      %v407 = vmul.f32 %v372, %v404
      %v408 = vmul.f32 %v377, %v404
      %v409 = vmul.f32 %v380, %v404
      %v410 = vmul.f32 %v385, %v404
      %v411 = vmul.f32 %v388, %v404
      %v412 = vmul.f32 %v393, %v404
      %v413 = vmul.f32 %v396, %v404
      %v414 = vld [vmem:[%s3] sm:$0x1]
      %v416 = vlaneseq
      %v417 = vshrl.u32 %v416, 7
      %v418 = vsub.s32 0, %v417
      %v419 = vrot.slane %v414, %v418
      %v421 = vadd.f32 %v406, %v419
      %v422 = vadd.f32 %v407, %v419
      %v423 = vadd.f32 %v408, %v419
      %v424 = vadd.f32 %v409, %v419
      %v425 = vadd.f32 %v410, %v419
      %v426 = vadd.f32 %v411, %v419
      %v427 = vadd.f32 %v412, %v419
      %v428 = vadd.f32 %v413, %v419
      %vm429 = vcmp.gt.f32.partialorder %v421, 0.0
      %vm430 = vcmp.gt.f32.partialorder %v422, 0.0
      %vm431 = vcmp.gt.f32.partialorder %v423, 0.0
      %vm432 = vcmp.gt.f32.partialorder %v424, 0.0
      %vm433 = vcmp.gt.f32.partialorder %v425, 0.0
      %vm434 = vcmp.gt.f32.partialorder %v426, 0.0
      %vm435 = vcmp.gt.f32.partialorder %v427, 0.0
      %vm436 = vcmp.gt.f32.partialorder %v428, 0.0
      %v437 = vmul.f32 %v421, 0.2
      %v438 = vmul.f32 %v422, 0.2
      %v439 = vmul.f32 %v423, 0.2
      %v440 = vmul.f32 %v424, 0.2
      %v441 = vmul.f32 %v425, 0.2
      %v442 = vmul.f32 %v426, 0.2
      %v443 = vmul.f32 %v427, 0.2
      %v444 = vmul.f32 %v428, 0.2
      %v445 = vsel %vm429, %v421, %v437
      %v446 = vsel %vm430, %v422, %v438
      %v447 = vsel %vm431, %v423, %v439
      %v448 = vsel %vm432, %v424, %v440
      %v449 = vsel %vm433, %v425, %v441
      %v450 = vsel %vm434, %v426, %v442
      %v451 = vsel %vm435, %v427, %v443
      %v452 = vsel %vm436, %v428, %v444
      %v453 = vpack.c.bf16 %v446, %v445
      %v454 = vpack.c.bf16 %v448, %v447
      %v455 = vpack.c.bf16 %v450, %v449
      %v456 = vpack.c.bf16 %v452, %v451
      %v461 = vunpack.c.l.b16 %v453
      %v462 = vunpack.c.h.b16 %v453
      %v463 = vunpack.c.l.b16 %v454
      %v464 = vunpack.c.h.b16 %v454
      %v465 = vunpack.c.l.b16 %v455
      %v466 = vunpack.c.h.b16 %v455
      %v467 = vunpack.c.l.b16 %v456
      %v468 = vunpack.c.h.b16 %v456
      %v469 = vpack.c.b16 %v461, %v461
      %v470 = vpack.c.b16 %v462, %v462
      %v471 = vpack.c.b16 %v463, %v463
      %v472 = vpack.c.b16 %v464, %v464
      %v473 = vpack.c.b16 %v465, %v465
      %v474 = vpack.c.b16 %v466, %v466
      %v475 = vpack.c.b16 %v467, %v467
      %v476 = vpack.c.b16 %v468, %v468
      %485 = vst [vmem:[%s202] sm:$0xf] %v469
      %486 = vst [vmem:[%s202 + $0x4] sm:$0xf] %v470
      %487 = vst [vmem:[%s202 + $0x8] sm:$0xf] %v471
      %488 = vst [vmem:[%s202 + $0xc] sm:$0xf] %v472
      %489 = vst [vmem:[%s202 + $0x10] sm:$0xf] %v473
      %490 = vst [vmem:[%s202 + $0x14] sm:$0xf] %v474
      %491 = vst [vmem:[%s202 + $0x18] sm:$0xf] %v475
      %492 = vst [vmem:[%s202 + $0x1c] sm:$0xf] %v476
      %s493 = smul.u32 8, %s15
      %p494 = scmp.lt.s32.totalorder %s493, 15
      %s495 = scalar_select %p494, %s493, 15
      %s496 = smul.addr %s495, 4
      %s497 = scalar_lea.vmem %s4, %s496
      // Predicated region
      $region37: #{decoder_forward.8} parent=35 // pred_check
        %p498 = pneg %p122
      $region38: #{decoder_forward.8} parent=35 // pred_check_branch
        %500 = sbr.rel (%p498) target = $region40
      $region39: #{decoder_forward.8} parent=35 // pred_region
        %s501 = smul.u32 8, %s15
      $region40: #{decoder_forward.8} parent=35 // pred_fallthru
        _
    $region36: #{decoder_forward.8} parent=5 // pred_fallthru
      _
    %p502 = scmp.le.s32.totalorder 2, %s10
    // Predicated region
    $region41: #{decoder_forward.8} parent=5 // pred_check
      %p503 = pneg %p502
    $region42: #{decoder_forward.8} parent=5 // pred_check_branch
      %505 = sbr.rel (%p503) target = $region44
    $region43: #{decoder_forward.8} parent=5 // pred_region
      %s506 = ssub.s32 %s10, 2
      // Predicated region
      $region45: #{decoder_forward.8} parent=43 // pred_check
        %p507 = pneg %p128
      $region46: #{decoder_forward.8} parent=43 // pred_check_branch
        %509 = sbr.rel (%p507) target = $region48
      $region47: #{decoder_forward.8} parent=43 // pred_region
        %s510 = smul.u32 8, %s16
        %p511 = scmp.lt.s32.totalorder %s510, 15
        %s512 = scalar_select %p511, %s510, 15
        %s513 = smul.addr %s512, 4
        %s514 = scalar_lea.vmem %s4, %s513
      $region48: #{decoder_forward.8} parent=43 // pred_fallthru
        _
    $region44: #{decoder_forward.8} parent=5 // pred_fallthru
      _
  $region6: #{decoder_forward.8} parent=0 // loop_footer
    %s14 = sadd.s32 1, %s10
  $region7: #{decoder_forward.8} parent=0 // loop_footer_branch
    %9 = sbr.rel target = $region3
  $region8: #{decoder_forward.8} parent=0 // loop_exit
    _

// kernel: decoder_forward.9
$region0: #{decoder_forward.9}
  #allocation0 [shape = 'u32[]', space=smem, size = 0x4, offset = 0x4, fixed_abs, tag = 'smem constant byte address 0x4 - core index']
  #allocation1 [shape = 'u32[144,128]{1,0:T(1,128)}', space=vmem, size = 0x12000, scoped, tag = 'internal scratch']
  %s0 = inlined_call_operand.vmem [shape: bf16[128,144], index: 0, kind: input, shape index: {}]
  %s1 = inlined_call_operand.vmem [shape: bf16[144,128], index: 1, kind: input, shape index: {}]
  %s2 = inlined_call_operand.vmem [shape: bf16[128,128], index: 2, kind: output, shape index: {}]
  %s3 = sld [smem:[#allocation0]]
  $region41: #{decoder_forward.9} parent=0
    _
  %s5 = ssub.s32 1, %s3
  %s6 = scalar_select 0, %s5, %s3
  loop: start=0, step=1, limit=4
  $region2: #{decoder_forward.9} parent=0 // loop_pre_header
    _
  $region3: #{decoder_forward.9} parent=0 // loop_header
    %s8 = sphi 0, %s12
    %p9 = scmp.ge.s32.totalorder %s8, 4
    %s18 = sphi 0, %s20
    %s21 = sphi 0, %s18
    %s22 = sphi 0, %s21
    %s38 = sphi 0, %s22
    %s42 = sphi 0, %s42
    %s44 = sphi 0, %s42
    %s45 = sphi 0, %s44
    %s59 = sphi 0, %s45
    %s65 = sphi 0, %s67
    %s68 = sphi 0, %s65
    %s69 = sphi 0, %s68
    %s85 = sphi 0, %s69
  $region4: #{decoder_forward.9} parent=0 // loop_header_branch
    %11 = sbr.rel (%p9) target = $region8
  $region5: #{decoder_forward.9} parent=0 // loop_body
    %s13 = ssub.s32 %s8, 1
    %s14 = ssub.s32 %s8, 2
    %s15 = sadd.s32 %s8, 1
    %s16 = ssub.s32 %s8, %s15
    %p17 = scmp.eq.s32.totalorder %s16, 0
    %s19 = sadd.s32 %s18, 1
    %s20 = scalar_select %p17, %s18, %s19
    %p23 = pneg %p17
    %p24 = scmp.eq.s32.totalorder %s8, 1
    %p25 = por %p23, %p24
    %p26 = scmp.ne.s32.totalorder %s18, %s21
    %p27 = scmp.eq.s32.totalorder %s8, 0
    %p28 = por %p26, %p27
    %p29 = scmp.ne.s32.totalorder %s18, %s21
    %p30 = scmp.eq.s32.totalorder %s13, 1
    %p31 = por %p29, %p30
    %p32 = scmp.ne.s32.totalorder %s21, %s22
    %p33 = scmp.eq.s32.totalorder %s13, 0
    %p34 = por %p32, %p33
    %p35 = scmp.ne.s32.totalorder %s21, %s22
    %p36 = scmp.eq.s32.totalorder %s14, 1
    %p37 = por %p35, %p36
    %p39 = scmp.ne.s32.totalorder %s22, %s38
    %p40 = scmp.eq.s32.totalorder %s14, 0
    %p41 = por %p39, %p40
    %s43 = sadd.s32 %s42, 1
    %p46 = scmp.eq.s32.totalorder %s8, 1
    %p47 = scmp.ne.s32.totalorder %s42, %s44
    %p48 = scmp.eq.s32.totalorder %s8, 0
    %p49 = por %p47, %p48
    %p50 = scmp.ne.s32.totalorder %s42, %s44
    %p51 = scmp.eq.s32.totalorder %s13, 1
    %p52 = por %p50, %p51
    %p53 = scmp.ne.s32.totalorder %s44, %s45
    %p54 = scmp.eq.s32.totalorder %s13, 0
    %p55 = por %p53, %p54
    %p56 = scmp.ne.s32.totalorder %s44, %s45
    %p57 = scmp.eq.s32.totalorder %s14, 1
    %p58 = por %p56, %p57
    %p60 = scmp.ne.s32.totalorder %s45, %s59
    %p61 = scmp.eq.s32.totalorder %s14, 0
    %p62 = por %p60, %p61
    %s63 = ssub.s32 %s8, %s15
    %p64 = scmp.eq.s32.totalorder %s63, 0
    %s66 = sadd.s32 %s65, 1
    %s67 = scalar_select %p64, %s65, %s66
    %p70 = pneg %p64
    %p71 = scmp.eq.s32.totalorder %s8, 1
    %p72 = por %p70, %p71
    %p73 = scmp.ne.s32.totalorder %s65, %s68
    %p74 = scmp.eq.s32.totalorder %s8, 0
    %p75 = por %p73, %p74
    %p76 = scmp.ne.s32.totalorder %s65, %s68
    %p77 = scmp.eq.s32.totalorder %s13, 1
    %p78 = por %p76, %p77
    %p79 = scmp.ne.s32.totalorder %s68, %s69
    %p80 = scmp.eq.s32.totalorder %s13, 0
    %p81 = por %p79, %p80
    %p82 = scmp.ne.s32.totalorder %s68, %s69
    %p83 = scmp.eq.s32.totalorder %s14, 1
    %p84 = por %p82, %p83
    %p86 = scmp.ne.s32.totalorder %s69, %s85
    %p87 = scmp.eq.s32.totalorder %s14, 0
    %p88 = por %p86, %p87
    %p89 = scmp.le.s32.totalorder 1, %s8
    %p90 = scmp.lt.s32.totalorder %s8, 3
    %p91 = pnand %p89, %p90
    %p92 = pneg %p91
    // Predicated region
    $region9: #{decoder_forward.9} parent=5 // pred_check
      _
    $region10: #{decoder_forward.9} parent=5 // pred_check_branch
      %94 = sbr.rel (%p91) target = $region12
    $region11: #{decoder_forward.9} parent=5 // pred_region
      %s95 = ssub.s32 %s8, 1
      // Predicated region
      $region13: #{decoder_forward.9} parent=11 // pred_check
        %p96 = pneg %p55
      $region14: #{decoder_forward.9} parent=11 // pred_check_branch
        %98 = sbr.rel (%p96) target = $region16
      $region15: #{decoder_forward.9} parent=11 // pred_region
        _
      $region16: #{decoder_forward.9} parent=11 // pred_fallthru
        _
    $region12: #{decoder_forward.9} parent=5 // pred_fallthru
      _
    %p99 = scmp.lt.s32.totalorder %s8, 2
    // Predicated region
    $region17: #{decoder_forward.9} parent=5 // pred_check
      %p100 = pneg %p99
    $region18: #{decoder_forward.9} parent=5 // pred_check_branch
      %102 = sbr.rel (%p100) target = $region20
    $region19: #{decoder_forward.9} parent=5 // pred_region
      // Predicated region
      $region21: #{decoder_forward.9} parent=19 // pred_check
        %p103 = pneg %p28
      $region22: #{decoder_forward.9} parent=19 // pred_check_branch
        %105 = sbr.rel (%p103) target = $region24
      $region23: #{decoder_forward.9} parent=19 // pred_region
        %s106 = smul.u32 8, %s8
        %p107 = scmp.lt.s32.totalorder %s106, 15
        %s108 = scalar_select %p107, %s106, 15
        %s109 = smul.addr %s108, 2
        %s110 = smul.addr %s109, 4
        %s111 = scalar_lea.vmem %s0, %s110
        %s112 = smul.u32 8, %s8
      $region24: #{decoder_forward.9} parent=19 // pred_fallthru
        _
    $region20: #{decoder_forward.9} parent=5 // pred_fallthru
      _
    %p113 = scmp.le.s32.totalorder 1, %s8
    %p114 = scmp.lt.s32.totalorder %s8, 3
    %p115 = pnand %p113, %p114
    %p116 = pneg %p115
    // Predicated region
    $region25: #{decoder_forward.9} parent=5 // pred_check
      _
    $region26: #{decoder_forward.9} parent=5 // pred_check_branch
      %118 = sbr.rel (%p115) target = $region28
    $region27: #{decoder_forward.9} parent=5 // pred_region
      %s119 = ssub.s32 %s8, 1
      %s120 = smul.u32 8, %s13
      %p121 = scmp.lt.s32.totalorder %s120, 15
      %s122 = scalar_select %p121, %s120, 15
      %s123 = smul.addr %s122, 2
      %s124 = smul.addr %s123, 4
      %s125 = scalar_lea.vmem %s0, %s124
      %p126 = pneg %p34
      %p127 = pneg %p31
      %p128 = pneg %p55
      %p129 = pneg %p52
      %p130 = pneg %p81
      %p131 = pneg %p78
      %s132 = smul.u32 8, %s13
      %p133 = scmp.lt.s32.totalorder %s132, 15
      %s134 = scalar_select %p133, %s132, 15
      %s135 = smul.addr %s134, 4
      %s136 = scalar_lea.vmem %s2, %s135
      %s137 = smul.u32 8, %s13
      %p138 = scmp.lt.s32.totalorder %s137, 15
      %s139 = scalar_select %p138, %s137, 15
      %s140 = smul.addr %s139, 2
      %s141 = smul.addr %s140, 4
      %s142 = scalar_lea.vmem %s0, %s141
      %s143 = smul.u32 8, %s13
      %s144 = smul.u32 8, %s13
      %p145 = scmp.lt.s32.totalorder %s144, 15
      %s146 = scalar_select %p145, %s144, 15
      %s147 = smul.addr %s146, 4
      %s148 = scalar_lea.vmem %s2, %s147
      %s149 = smul.u32 8, %s13
      %v151 = vld [vmem:[%s142] sm:$0xff]
      %v152 = vld [vmem:[%s142 + $0x8] sm:$0xff]
      %v153 = vld [vmem:[%s142 + $0x10] sm:$0xff]
      %v154 = vld [vmem:[%s142 + $0x18] sm:$0xff]
      %v155 = vld [vmem:[%s142 + $0x20] sm:$0xff]
      %v156 = vld [vmem:[%s142 + $0x28] sm:$0xff]
      %v157 = vld [vmem:[%s142 + $0x30] sm:$0xff]
      %v158 = vld [vmem:[%s142 + $0x38] sm:$0xff]
      %v159 = vld [vmem:[%s1] sm:$0xf]
      %v160 = vld [vmem:[%s1 + $0x4] sm:$0xf]
      %v161 = vld [vmem:[%s1 + $0x8] sm:$0xf]
      %v162 = vld [vmem:[%s1 + $0xc] sm:$0xf]
      %v163 = vld [vmem:[%s1 + $0x10] sm:$0xf]
      %v164 = vld [vmem:[%s1 + $0x14] sm:$0xf]
      %v165 = vld [vmem:[%s1 + $0x18] sm:$0xf]
      %v166 = vld [vmem:[%s1 + $0x1c] sm:$0xf]
      %v167 = vld [vmem:[%s1 + $0x20] sm:$0xf]
      %v168 = vld [vmem:[%s1 + $0x24] sm:$0xf]
      %v169 = vld [vmem:[%s1 + $0x28] sm:$0xf]
      %v170 = vld [vmem:[%s1 + $0x2c] sm:$0xf]
      %v171 = vld [vmem:[%s1 + $0x30] sm:$0xf]
      %v172 = vld [vmem:[%s1 + $0x34] sm:$0xf]
      %v173 = vld [vmem:[%s1 + $0x38] sm:$0xf]
      %v174 = vld [vmem:[%s1 + $0x3c] sm:$0xf]
      %v175 = vld [vmem:[%s1 + $0x40] sm:$0xf]
      %v176 = vld [vmem:[%s1 + $0x44] sm:$0xf]
      %v185 = vunpack.c.l.b16 %v151
      %v186 = vunpack.c.h.b16 %v151
      %v187 = vunpack.c.l.b16 %v152
      %v188 = vunpack.c.h.b16 %v152
      %v189 = vunpack.c.l.b16 %v153
      %v190 = vunpack.c.h.b16 %v153
      %v191 = vunpack.c.l.b16 %v154
      %v192 = vunpack.c.h.b16 %v154
      %v193 = vunpack.c.l.b16 %v155
      %v194 = vunpack.c.h.b16 %v155
      %v195 = vunpack.c.l.b16 %v156
      %v196 = vunpack.c.h.b16 %v156
      %v197 = vunpack.c.l.b16 %v157
      %v198 = vunpack.c.h.b16 %v157
      %v199 = vunpack.c.l.b16 %v158
      %v200 = vunpack.c.h.b16 %v158
      %v201 = vpack.c.b16 %v187, %v185
      %v202 = vpack.c.b16 %v188, %v186
      %v203 = vpack.c.b16 %v191, %v189
      %v204 = vpack.c.b16 %v192, %v190
      %v205 = vpack.c.b16 %v195, %v193
      %v206 = vpack.c.b16 %v196, %v194
      %v207 = vpack.c.b16 %v199, %v197
      %v208 = vpack.c.b16 %v200, %v198
      %v231 = vunpack.c.l.b16 %v159
      %v232 = vunpack.c.l.b16 %v160
      %v233 = vunpack.c.l.b16 %v161
      %v234 = vunpack.c.l.b16 %v162
      %v235 = vunpack.c.l.b16 %v163
      %v236 = vunpack.c.l.b16 %v164
      %v237 = vunpack.c.l.b16 %v165
      %v238 = vunpack.c.l.b16 %v166
      %v239 = vunpack.c.l.b16 %v167
      %v240 = vunpack.c.l.b16 %v168
      %v241 = vunpack.c.l.b16 %v169
      %v242 = vunpack.c.l.b16 %v170
      %v243 = vunpack.c.l.b16 %v171
      %v244 = vunpack.c.l.b16 %v172
      %v245 = vunpack.c.l.b16 %v173
      %v246 = vunpack.c.l.b16 %v174
      %v247 = vunpack.c.l.b16 %v175
      %v248 = vunpack.c.l.b16 %v176
      %v249 = vpack.c.b16 %v232, %v231
      %v250 = vpack.c.b16 %v234, %v233
      %v251 = vpack.c.b16 %v236, %v235
      %v252 = vpack.c.b16 %v238, %v237
      %v253 = vpack.c.b16 %v240, %v239
      %v254 = vpack.c.b16 %v242, %v241
      %v255 = vpack.c.b16 %v244, %v243
      %v256 = vpack.c.b16 %v246, %v245
      %v257 = vpack.c.b16 %v248, %v247
      %vm267 = vcmask 130048
      %v269 = vsel %vm267, %v202, 0
      %v272 = vsel %vm267, %v204, 0
      %v275 = vsel %vm267, %v206, 0
      %v278 = vsel %vm267, %v208, 0
      %280 = vmatprep.subr.bf16.mxu0 0
      %281 = vmatpush1.bf16.msra.mxu0 %v249
      %282 = vmatprep.subr.bf16.mxu0 0
      %283 = vmatpush1.bf16.msra.mxu0 %v250
      %284 = vmatprep.subr.bf16.mxu0 0
      %285 = vmatpush1.bf16.msra.mxu0 %v251
      %286 = vmatprep.subr.bf16.mxu0 0
      %287 = vmatpush1.bf16.msra.mxu0 %v252
      %288 = vmatprep.subr.bf16.mxu0 0
      %289 = vmatpush1.bf16.msra.mxu0 %v253
      %290 = vmatprep.subr.bf16.mxu0 0
      %291 = vmatpush1.bf16.msra.mxu0 %v254
      %292 = vmatprep.subr.bf16.mxu0 0
      %293 = vmatpush1.bf16.msra.mxu0 %v255
      %294 = vmatprep.subr.bf16.mxu0 0
      %295 = vmatpush1.bf16.msra.mxu0 %v256
      %296 = vmatprep.subr.bf16.mxu0 0
      %297 = vmatpush1.bf16.msra.mxu0 %v257
      %298 = vmatprep.subr.bf16.mxu0 0
      %299 = vmatpush1.bf16.msra.mxu0 0
      %300 = vmatprep.subr.bf16.mxu0 0
      %301 = vmatpush1.bf16.msra.mxu0 0
      %302 = vmatprep.subr.bf16.mxu0 0
      %303 = vmatpush1.bf16.msra.mxu0 0
      %304 = vmatprep.subr.bf16.mxu0 0
      %305 = vmatpush1.bf16.msra.mxu0 0
      %306 = vmatprep.subr.bf16.mxu0 0
      %307 = vmatpush1.bf16.msra.mxu0 0
      %308 = vmatprep.subr.bf16.mxu0 0
      %309 = vmatpush1.bf16.msra.mxu0 0
      %310 = vmatprep.subr.bf16.mxu0 0
      %311 = vmatpush1.bf16.msra.mxu0 0
      %312 = vmatprep.mubr.bf16.mxu0 %v269
      %313 = vmatmul.mubr.bf16.gmra.mrb[0].mxu0 %v201
      %v314 = vpop.f32.mrb[0].mxu0
      %v315 = vadd.f32 0.0, %v314
      %v316 = vpop.f32.mrb[0].mxu0
      %v317 = vpop.f32.mrb[0].mxu0
      %v318 = vadd.f32 0.0, %v317
      %v319 = vpop.f32.mrb[0].mxu0
      %320 = vmatprep.mubr.bf16.mxu0 %v272
      %321 = vmatmul.mubr.bf16.gmra.mrb[0].mxu0 %v203
      %v322 = vpop.f32.mrb[0].mxu0
      %v323 = vadd.f32 0.0, %v322
      %v324 = vpop.f32.mrb[0].mxu0
      %v325 = vpop.f32.mrb[0].mxu0
      %v326 = vadd.f32 0.0, %v325
      %v327 = vpop.f32.mrb[0].mxu0
      %328 = vmatprep.mubr.bf16.mxu0 %v275
      %329 = vmatmul.mubr.bf16.gmra.mrb[0].mxu0 %v205
      %v330 = vpop.f32.mrb[0].mxu0
      %v331 = vadd.f32 0.0, %v330
      %v332 = vpop.f32.mrb[0].mxu0
      %v333 = vpop.f32.mrb[0].mxu0
      %v334 = vadd.f32 0.0, %v333
      %v335 = vpop.f32.mrb[0].mxu0
      %336 = vmatprep.mubr.bf16.mxu0 %v278
      %337 = vmatmul.mubr.bf16.gmra.mrb[0].mxu0 %v207
      %v338 = vpop.f32.mrb[0].mxu0
      %v339 = vadd.f32 0.0, %v338
      %v340 = vpop.f32.mrb[0].mxu0
      %v341 = vpop.f32.mrb[0].mxu0
      %v342 = vadd.f32 0.0, %v341
      %v343 = vpop.f32.mrb[0].mxu0
      %344 = vdwg.mxu0
      %v345 = vtanh.pop %v315
      %v346 = vtanh.pop %v318
      %v347 = vtanh.pop %v323
      %v348 = vtanh.pop %v326
      %v349 = vtanh.pop %v331
      %v350 = vtanh.pop %v334
      %v351 = vtanh.pop %v339
      %v352 = vtanh.pop %v342
      %v353 = vpack.c.bf16 %v346, %v345
      %v354 = vpack.c.bf16 %v348, %v347
      %v355 = vpack.c.bf16 %v350, %v349
      %v356 = vpack.c.bf16 %v352, %v351
      %v361 = vunpack.c.l.b16 %v353
      %v362 = vunpack.c.h.b16 %v353
      %v363 = vunpack.c.l.b16 %v354
      %v364 = vunpack.c.h.b16 %v354
      %v365 = vunpack.c.l.b16 %v355
      %v366 = vunpack.c.h.b16 %v355
      %v367 = vunpack.c.l.b16 %v356
      %v368 = vunpack.c.h.b16 %v356
      %v369 = vpack.c.b16 %v361, %v361
      %v370 = vpack.c.b16 %v362, %v362
      %v371 = vpack.c.b16 %v363, %v363
      %v372 = vpack.c.b16 %v364, %v364
      %v373 = vpack.c.b16 %v365, %v365
      %v374 = vpack.c.b16 %v366, %v366
      %v375 = vpack.c.b16 %v367, %v367
      %v376 = vpack.c.b16 %v368, %v368
      %385 = vst [vmem:[%s148] sm:$0xf] %v369
      %386 = vst [vmem:[%s148 + $0x4] sm:$0xf] %v370
      %387 = vst [vmem:[%s148 + $0x8] sm:$0xf] %v371
      %388 = vst [vmem:[%s148 + $0xc] sm:$0xf] %v372
      %389 = vst [vmem:[%s148 + $0x10] sm:$0xf] %v373
      %390 = vst [vmem:[%s148 + $0x14] sm:$0xf] %v374
      %391 = vst [vmem:[%s148 + $0x18] sm:$0xf] %v375
      %392 = vst [vmem:[%s148 + $0x1c] sm:$0xf] %v376
      %s393 = smul.u32 8, %s13
      %p394 = scmp.lt.s32.totalorder %s393, 15
      %s395 = scalar_select %p394, %s393, 15
      %s396 = smul.addr %s395, 4
      %s397 = scalar_lea.vmem %s2, %s396
      // Predicated region
      $region29: #{decoder_forward.9} parent=27 // pred_check
        %p398 = pneg %p78
      $region30: #{decoder_forward.9} parent=27 // pred_check_branch
        %400 = sbr.rel (%p398) target = $region32
      $region31: #{decoder_forward.9} parent=27 // pred_region
        %s401 = smul.u32 8, %s13
      $region32: #{decoder_forward.9} parent=27 // pred_fallthru
        _
    $region28: #{decoder_forward.9} parent=5 // pred_fallthru
      _
    %p402 = scmp.le.s32.totalorder 2, %s8
    // Predicated region
    $region33: #{decoder_forward.9} parent=5 // pred_check
      %p403 = pneg %p402
    $region34: #{decoder_forward.9} parent=5 // pred_check_branch
      %405 = sbr.rel (%p403) target = $region36
    $region35: #{decoder_forward.9} parent=5 // pred_region
      %s406 = ssub.s32 %s8, 2
      // Predicated region
      $region37: #{decoder_forward.9} parent=35 // pred_check
        %p407 = pneg %p84
      $region38: #{decoder_forward.9} parent=35 // pred_check_branch
        %409 = sbr.rel (%p407) target = $region40
      $region39: #{decoder_forward.9} parent=35 // pred_region
        %s410 = smul.u32 8, %s14
        %p411 = scmp.lt.s32.totalorder %s410, 15
        %s412 = scalar_select %p411, %s410, 15
        %s413 = smul.addr %s412, 4
        %s414 = scalar_lea.vmem %s2, %s413
      $region40: #{decoder_forward.9} parent=35 // pred_fallthru
        _
    $region36: #{decoder_forward.9} parent=5 // pred_fallthru
      _
  $region6: #{decoder_forward.9} parent=0 // loop_footer
    %s12 = sadd.s32 1, %s8
  $region7: #{decoder_forward.9} parent=0 // loop_footer_branch
    %7 = sbr.rel target = $region3
  $region8: #{decoder_forward.9} parent=0 // loop_exit
    _

</llo_original>
